<compile_context>
chip_gen: v7x
topology: tpu7x:2x2x1
jax: 0.10.0
libtpu: 0.0.40
codegen_flags: <defaults>
</compile_context>

<pallas_src>
import functools

import jax
import jax.numpy as jnp
from jax import lax
from jax.experimental import pallas as pl
from jax.experimental.pallas import tpu as pltpu


def _round_up(x, m):
    return ((x + m - 1) // m) * m


def _next_pow2(x):
    return 1 if x <= 1 else 1 << (int(x) - 1).bit_length()


def _tpu_defaults():
    """(row-tile cap, vmem_limit_bytes) per TPU generation."""
    try:
        kind = jax.devices()[0].device_kind.lower()
    except Exception:
        kind = ""
    if "v5" in kind:
        return 128, 100 << 20   # v5e: TQ=128 (4x128 MXU), raise budget (128 MiB chip)
    if "v6" in kind:
        return 256, 100 << 20   # v6e: large tiles, raise budget (128 MiB chip)
    return 256, 48 << 20        # v7x / unknown: conservative (64 MiB per-core VMEM)


def _supcon_kernel(feat_ref, lab_row_ref, lab_col_ref, bias_ref, colid_ref,
                   cnt_ref, out_ref, m_sc, l_sc, p_sc, *,
                   inv_temp, scale, n_valid):
    """Grid = (row tiles [parallel], column tiles [arbitrary / reduction]).

    feat_ref:    [Np, Dp]  resident contrast features (bf16 or f32)
    lab_row_ref: [TQ, 1]   int32 labels of this tile's anchor rows
    lab_col_ref: [1, TN]   int32 labels of this column tile (pad = sentinel)
    bias_ref:    [1, TN]   f32: 0.0 for real columns, -1e30 for padded columns
    colid_ref:   [1, TN]   int32 global column index of this column tile
    cnt_ref:     [TQ, 1]   f32 positive count per anchor (precomputed, >= 1)
    out_ref:     [TQ, 1]   f32 per-anchor loss (0 for padded rows)
    m_sc/l_sc/p_sc: [TQ,1] f32 running max / denominator / positive-logit sum.
    """
    i = pl.program_id(0)
    j = pl.program_id(1)
    tq = out_ref.shape[0]
    tn = bias_ref.shape[1]

    @pl.when(j == 0)
    def _():
        m_sc[...] = jnp.full((tq, 1), -jnp.inf, jnp.float32)
        l_sc[...] = jnp.zeros((tq, 1), jnp.float32)
        p_sc[...] = jnp.zeros((tq, 1), jnp.float32)

    row_start = pl.multiple_of(i * tq, tq)
    col_start = pl.multiple_of(j * tn, tn)
    f_rows = feat_ref[pl.ds(row_start, tq), :]                       # (TQ, Dp)
    f_cols = feat_ref[pl.ds(col_start, tn), :]                       # (TN, Dp)

    # Gram tile: contract the feature axis of both operands (MXU transposed-RHS
    # path, no XLU transpose), f32 accumulation.
    dots = lax.dot_general(f_rows, f_cols,
                           dimension_numbers=(((1,), (1,)), ((), ())),
                           preferred_element_type=jnp.float32)       # (TQ, TN)

    # Scaled logits with the padded-column -inf bias folded in BEFORE the max,
    # so padded columns never influence the max nor the denominator.
    s = dots * inv_temp + bias_ref[...]                               # (TQ, TN)

    # Self-contrast diagonal: one compare against the streamed column ids.
    row_ids = row_start + lax.broadcasted_iota(jnp.int32, (tq, 1), 0)
    diag = colid_ref[...] == row_ids                                  # (TQ, TN)

    # Online softmax denominator (flash-style) with running max in scratch.
    m_prev = m_sc[...]
    m_new = jnp.maximum(m_prev, jnp.max(s, axis=1, keepdims=True))
    e = jnp.where(diag, 0.0, jnp.exp(s - m_new))
    l_sc[...] = l_sc[...] * jnp.exp(m_prev - m_new) + jnp.sum(e, axis=1, keepdims=True)
    m_sc[...] = m_new

    # Positive-logit sum.  The diagonal always label-matches, so
    # (pos != diag) == pos & ~diag (pad columns never match: sentinel label).
    pos = lab_row_ref[...] == lab_col_ref[...]
    p_sc[...] += jnp.sum(jnp.where(pos != diag, s, 0.0), axis=1, keepdims=True)

    @pl.when(j == pl.num_programs(1) - 1)
    def _():
        log_denom = m_sc[...] + jnp.log(l_sc[...])
        mean_log_prob_pos = p_sc[...] / cnt_ref[...] - log_denom
        out_ref[...] = jnp.where(row_ids < n_valid,
                                 -scale * mean_log_prob_pos, 0.0)


def supcon_loss(features, labels=None, mask=None, temperature=0.07,
                contrast_mode='all', base_temperature=0.07,
                block_rows=None, block_cols=None, matmul_dtype=jnp.bfloat16):
    """JAX/Pallas equivalent of SupConLoss.forward(features, labels).

    features: [bsz, n_views, feat_dim] (extra trailing dims are flattened)
    labels:   [bsz] integer class labels (None -> SimCLR / eye-mask case)
    returns:  scalar float32 loss
    """
    if features.ndim < 3:
        raise ValueError('`features` needs to be [bsz, n_views, ...]')
    if features.ndim > 3:
        features = features.reshape(features.shape[0], features.shape[1], -1)
    if contrast_mode != 'all':
        # TODO(synk): contrast_mode == 'one' (anchor = first view only) not implemented.
        raise ValueError('only contrast_mode="all" is implemented')
    if labels is not None and mask is not None:
        raise ValueError('Cannot define both `labels` and `mask`')
    if mask is not None:
        # TODO(synk): explicit [bsz, bsz] mask not implemented; pass `labels` instead.
        raise ValueError('explicit `mask` is not implemented; pass `labels`')

    bsz, n_views, d = features.shape
    n = bsz * n_views

    if labels is None:
        # SimCLR degenerate case: eye(bsz) mask == "every sample is its own class".
        labels = jnp.arange(bsz, dtype=jnp.int32)
    labels = jnp.asarray(labels).reshape(-1).astype(jnp.int32)
    if labels.shape[0] != bsz:
        raise ValueError('Num of labels does not match num of features')

    # contrast_feature = torch.cat(torch.unbind(features, dim=1), dim=0) -> [N, D]
    cf = jnp.transpose(features, (1, 0, 2)).reshape(n, d).astype(jnp.float32)

    # ---- tiling (generation-aware) -------------------------------------------
    tq_cap, vmem_limit = _tpu_defaults()
    if block_rows is not None:
        tq_cap = max(8, _next_pow2(int(block_rows)))
    tn_cap = 512 if block_cols is None else max(128, _next_pow2(int(block_cols)))

    tn = min(tn_cap, max(128, _next_pow2(n)))   # column tile, multiple of 128
    tq = min(tq_cap, tn)                        # row tile, power of two <= tn
    n_pad = _round_up(n, max(tq, tn))
    d_pad = _round_up(d, 128)

    cf = jnp.pad(cf, ((0, n_pad - n), (0, d_pad - d)))
    cf_mm = cf.astype(matmul_dtype)   # bf16 matmul operands (f32 accumulate in-kernel)

    # Per-row / per-column labels in view-major order; padded entries get
    # (min label - 1) so they can never match a real label (pad guard for the
    # positive mask without per-element cost).
    pad_label = jnp.min(labels) - jnp.int32(1)
    labels_tiled = jnp.tile(labels, (n_views,))                             # [N]
    labels_padded = jnp.concatenate(
        [labels_tiled, jnp.full((n_pad - n,), pad_label, jnp.int32)])
    labels_row = labels_padded.reshape(n_pad, 1)
    labels_col = labels_padded.reshape(1, n_pad)

    # Per-column additive bias (applied before the row max) and column ids.
    col_idx = jnp.arange(n_pad, dtype=jnp.int32)
    col_bias = jnp.where(col_idx < n, 0.0, -1e30).astype(jnp.float32).reshape(1, n_pad)
    col_ids = col_idx.reshape(1, n_pad)

    # Analytic positive count per anchor: (#same-label samples in batch)*n_views - 1.
    same = (labels[:, None] == labels[None, :]).astype(jnp.float32)         # [bsz,bsz]
    cnt_b = jnp.sum(same, axis=1) * float(n_views) - 1.0                    # [bsz]
    pos_cnt = jnp.tile(cnt_b, (n_views,))                                   # [N]
    pos_cnt = jnp.pad(pos_cnt, (0, n_pad - n), constant_values=1.0)         # pads -> 1
    pos_cnt = pos_cnt.reshape(n_pad, 1).astype(jnp.float32)

    # VMEM budget sanity check (resident features are single-buffered).
    feat_bytes = n_pad * d_pad * jnp.dtype(matmul_dtype).itemsize
    work_bytes = 8 * tq * tn * 4 + 4 * tn * 4 + 16 * tq * 4
    est = feat_bytes + work_bytes + (1 << 20)
    if est > vmem_limit:
        # TODO(synk): fall back to streaming feature column blocks from HBM
        # (flash-style 2-D feature BlockSpec) when the resident footprint exceeds
        # the per-core VMEM budget (matters for very large N*D, esp. on v7x).
        vmem_limit = min(est + (8 << 20), 110 << 20)

    kernel = functools.partial(
        _supcon_kernel,
        inv_temp=float(1.0 / temperature),
        scale=float(temperature / base_temperature),
        n_valid=n,
    )

    def build(feature_spec):
        return pl.pallas_call(
            kernel,
            out_shape=jax.ShapeDtypeStruct((n_pad, 1), jnp.float32),
            grid_spec=pltpu.PrefetchScalarGridSpec(
                num_scalar_prefetch=0,
                grid=(n_pad // tq, n_pad // tn),
                in_specs=[
                    feature_spec,                                    # resident features
                    pl.BlockSpec((tq, 1), lambda i, j: (i, 0)),      # row labels
                    pl.BlockSpec((1, tn), lambda i, j: (0, j)),      # col labels
                    pl.BlockSpec((1, tn), lambda i, j: (0, j)),      # col pad bias
                    pl.BlockSpec((1, tn), lambda i, j: (0, j)),      # col ids
                    pl.BlockSpec((tq, 1), lambda i, j: (i, 0)),      # positive counts
                ],
                out_specs=pl.BlockSpec((tq, 1), lambda i, j: (i, 0)),
                scratch_shapes=[pltpu.VMEM((tq, 1), jnp.float32)] * 3,
            ),
            compiler_params=pltpu.CompilerParams(
                dimension_semantics=("parallel", "arbitrary"),
                vmem_limit_bytes=int(vmem_limit)),
        )

    args = (cf_mm, labels_row, labels_col, col_bias, col_ids, pos_cnt)
    try:
        # Constant-index resident block -> single-buffer it (halves its VMEM).
        feat_spec = pl.BlockSpec((n_pad, d_pad), lambda i, j: (0, 0),
                                 pipeline_mode=pl.Buffered(1))
        per_anchor = build(feat_spec)(*args)
    except Exception:
        # Fallback: default (double-buffered) pipelining for the resident block.
        per_anchor = build(pl.BlockSpec((n_pad, d_pad), lambda i, j: (0, 0)))(*args)

    # NOTE: like the PyTorch original, an anchor with zero positives yields NaN
    # (pos_cnt == 0); n_views >= 2 guarantees at least one positive per anchor.
    return jnp.sum(per_anchor[:, 0]) / jnp.float32(n)


def _supcon_loss_ref(features, labels, temperature=0.07, base_temperature=0.07):
    """Pure-JAX reference mirroring the PyTorch code, for verification."""
    bsz, n_views, d = features.shape
    n = bsz * n_views
    cf = jnp.transpose(features, (1, 0, 2)).reshape(n, d).astype(jnp.float32)
    labels = jnp.asarray(labels).reshape(-1, 1)
    mask = jnp.tile((labels == labels.T).astype(jnp.float32), (n_views, n_views))
    dots = (cf @ cf.T) / temperature
    logits = dots - jnp.max(dots, axis=1, keepdims=True)
    logits_mask = 1.0 - jnp.eye(n, dtype=jnp.float32)
    mask = mask * logits_mask
    exp_logits = jnp.exp(logits) * logits_mask
    log_prob = logits - jnp.log(exp_logits.sum(1, keepdims=True))
    mean_log_prob_pos = (mask * log_prob).sum(1) / mask.sum(1)
    loss = -(temperature / base_temperature) * mean_log_prob_pos
    return loss.reshape(n_views, bsz).mean()


if __name__ == "__main__":
    key = jax.random.PRNGKey(0)
    k1, k2, k3, k4, k5, k6 = jax.random.split(key, 6)

    # Case 1: bsz=8, n_views=2, feat_dim=32 (N = 16) -- single tile.
    bsz, n_views, feat_dim = 8, 2, 32
    features = jax.random.normal(k1, (bsz, n_views, feat_dim), dtype=jnp.float32)
    features = features / jnp.linalg.norm(features, axis=-1, keepdims=True)
    labels = jax.random.randint(k2, (bsz,), 0, 3)

    ref = _supcon_loss_ref(features, labels)
    loss_f32 = jax.block_until_ready(
        supcon_loss(features, labels, matmul_dtype=jnp.float32))
    assert jnp.allclose(loss_f32, ref, rtol=1e-5, atol=1e-5), (loss_f32, ref)
    loss_bf16 = jax.block_until_ready(supcon_loss(features, labels))  # default bf16 matmul
    assert jnp.allclose(loss_bf16, ref, rtol=5e-2, atol=5e-2), (loss_bf16, ref)

    # Case 2: ragged N (bsz=5 -> N=10) exercises row/column padding + masking.
    features2 = jax.random.normal(k3, (5, 2, 48), dtype=jnp.float32)
    features2 = features2 / jnp.linalg.norm(features2, axis=-1, keepdims=True)
    labels2 = jax.random.randint(k4, (5,), 0, 2)
    ref2 = _supcon_loss_ref(features2, labels2)
    loss2 = jax.block_until_ready(
        supcon_loss(features2, labels2, matmul_dtype=jnp.float32))
    assert jnp.allclose(loss2, ref2, rtol=1e-5, atol=1e-5), (loss2, ref2)

    # Case 3: SimCLR degenerate case (labels=None -> eye mask).
    ref3 = _supcon_loss_ref(features, jnp.arange(bsz))
    loss3 = jax.block_until_ready(
        supcon_loss(features, None, matmul_dtype=jnp.float32))
    assert jnp.allclose(loss3, ref3, rtol=1e-5, atol=1e-5), (loss3, ref3)

    # Case 4: multiple row AND column tiles (grid (2, 2) with 128-wide tiles),
    # exercising the online-accumulation / scratch-reinit path.
    features4 = jax.random.normal(k5, (80, 2, 32), dtype=jnp.float32)
    features4 = features4 / jnp.linalg.norm(features4, axis=-1, keepdims=True)
    labels4 = jax.random.randint(k6, (80,), 0, 5)
    ref4 = _supcon_loss_ref(features4, labels4)
    loss4 = jax.block_until_ready(
        supcon_loss(features4, labels4, matmul_dtype=jnp.float32,
                    block_rows=128, block_cols=128))
    assert jnp.allclose(loss4, ref4, rtol=1e-4, atol=1e-5), (loss4, ref4)

    print("KERNEL_OK")
</pallas_src>

<mosaic_0001>
module attributes {stable_mosaic.version = 11 : i64} {
  func.func @_supcon_kernel(%arg0: i32, %arg1: i32, %arg2: memref<128x128xf32, #tpu.memory_space<vmem>>, %arg3: memref<128x1xi32, #tpu.memory_space<vmem>>, %arg4: memref<1x128xi32, #tpu.memory_space<vmem>>, %arg5: memref<1x128xf32, #tpu.memory_space<vmem>>, %arg6: memref<1x128xi32, #tpu.memory_space<vmem>>, %arg7: memref<128x1xf32, #tpu.memory_space<vmem>>, %arg8: memref<128x1xf32, #tpu.memory_space<vmem>>, %arg9: memref<128x1xf32, #tpu.memory_space<vmem>>, %arg10: memref<128x1xf32, #tpu.memory_space<vmem>>, %arg11: memref<128x1xf32, #tpu.memory_space<vmem>>) attributes {dimension_semantics = [#tpu.dimension_semantics<parallel>, #tpu.dimension_semantics<arbitrary>], iteration_bounds = array<i64: 1, 1>, scalar_prefetch = 0 : i64, scratch_operands = 3 : i64, tpu.core_type = #tpu.core_type<tc>, window_params = [{pipeline_mode = #tpu.pipeline_mode<synchronous>, transform_indices = @transform_0, window_bounds = array<i64: 128, 128>}, {transform_indices = @transform_1, window_bounds = array<i64: 128, 1>}, {transform_indices = @transform_2, window_bounds = array<i64: 1, 128>}, {transform_indices = @transform_3, window_bounds = array<i64: 1, 128>}, {transform_indices = @transform_4, window_bounds = array<i64: 1, 128>}, {transform_indices = @transform_5, window_bounds = array<i64: 128, 1>}, {transform_indices = @transform_6, window_bounds = array<i64: 128, 1>}]} {
    %c0_i32 = arith.constant 0 : i32
    %0 = arith.cmpi eq, %arg1, %c0_i32 : i32
    %1 = arith.extui %0 : i1 to i32
    %c0_i32_0 = arith.constant 0 : i32
    %2 = arith.cmpi ne, %1, %c0_i32_0 : i32
    scf.if %2 {
      %cst_31 = arith.constant 0xFF800000 : f32
      %58 = vector.broadcast %cst_31 : f32 to vector<128x1xf32>
      %c0_32 = arith.constant 0 : index
      %c0_33 = arith.constant 0 : index
      %59 = vector.load %arg9[%c0_32, %c0_33] : memref<128x1xf32, #tpu.memory_space<vmem>>, vector<128x1xf32>
      tpu.vector_store %arg9[%c0_32, %c0_33], %58 {strides = array<i32>} : memref<128x1xf32, #tpu.memory_space<vmem>>, vector<128x1xf32>,
      %cst_34 = arith.constant 0.000000e+00 : f32
      %60 = vector.broadcast %cst_34 : f32 to vector<128x1xf32>
      %c0_35 = arith.constant 0 : index
      %c0_36 = arith.constant 0 : index
      %61 = vector.load %arg10[%c0_35, %c0_36] : memref<128x1xf32, #tpu.memory_space<vmem>>, vector<128x1xf32>
      tpu.vector_store %arg10[%c0_35, %c0_36], %60 {strides = array<i32>} : memref<128x1xf32, #tpu.memory_space<vmem>>, vector<128x1xf32>,
      %cst_37 = arith.constant 0.000000e+00 : f32
      %62 = vector.broadcast %cst_37 : f32 to vector<128x1xf32>
      %c0_38 = arith.constant 0 : index
      %c0_39 = arith.constant 0 : index
      %63 = vector.load %arg11[%c0_38, %c0_39] : memref<128x1xf32, #tpu.memory_space<vmem>>, vector<128x1xf32>
      tpu.vector_store %arg11[%c0_38, %c0_39], %62 {strides = array<i32>} : memref<128x1xf32, #tpu.memory_space<vmem>>, vector<128x1xf32>,
    } else {
    }
    %c128_i32 = arith.constant 128 : i32
    %3 = arith.muli %arg0, %c128_i32 : i32
    %4 = tpu.assume_multiple %3, 128 : i32
    %c128_i32_1 = arith.constant 128 : i32
    %5 = arith.muli %arg1, %c128_i32_1 : i32
    %6 = tpu.assume_multiple %5, 128 : i32
    %7 = arith.index_cast %4 : i32 to index
    %c0 = arith.constant 0 : index
    %8 = vector.load %arg2[%7, %c0] : memref<128x128xf32, #tpu.memory_space<vmem>>, vector<128x128xf32>
    %9 = arith.index_cast %6 : i32 to index
    %c0_2 = arith.constant 0 : index
    %10 = vector.load %arg2[%9, %c0_2] : memref<128x128xf32, #tpu.memory_space<vmem>>, vector<128x128xf32>
    %cst = arith.constant dense<0.000000e+00> : vector<128x128xf32>
    %11 = tpu.matmul %8, %10, %cst {dimension_numbers = #tpu.dot_dimension_numbers<[1], [1], [0], [0], [0, 0, 1, 0], [], []>} : vector<128x128xf32>, vector<128x128xf32>, vector<128x128xf32> -> vector<128x128xf32>
    %cst_3 = arith.constant 14.2857141 : f32
    %12 = vector.broadcast %cst_3 : f32 to vector<128x128xf32>
    %13 = arith.mulf %11, %12 : vector<128x128xf32>
    %c0_4 = arith.constant 0 : index
    %c0_5 = arith.constant 0 : index
    %14 = vector.load %arg5[%c0_4, %c0_5] : memref<1x128xf32, #tpu.memory_space<vmem>>, vector<1x128xf32>
    %15 = vector.broadcast %14 : vector<1x128xf32> to vector<128x128xf32>
    %16 = arith.addf %13, %15 : vector<128x128xf32>
    %17 = tpu.iota {dimensions = array<i32: 0>} : vector<128x1xi32>
    %18 = vector.broadcast %4 : i32 to vector<128x1xi32>
    %19 = arith.addi %18, %17 : vector<128x1xi32>
    %c0_6 = arith.constant 0 : index
    %c0_7 = arith.constant 0 : index
    %20 = vector.load %arg6[%c0_6, %c0_7] : memref<1x128xi32, #tpu.memory_space<vmem>>, vector<1x128xi32>
    %21 = vector.broadcast %20 : vector<1x128xi32> to vector<128x128xi32>
    %22 = vector.broadcast %19 : vector<128x1xi32> to vector<128x128xi32>
    %23 = arith.cmpi eq, %21, %22 : vector<128x128xi32>
    %c0_8 = arith.constant 0 : index
    %c0_9 = arith.constant 0 : index
    %24 = vector.load %arg9[%c0_8, %c0_9] : memref<128x1xf32, #tpu.memory_space<vmem>>, vector<128x1xf32>
    %cst_10 = arith.constant dense<0xFF800000> : vector<128xf32>
    %25 = vector.multi_reduction <maximumf>, %16, %cst_10 [1] : vector<128x128xf32> to vector<128xf32>
    %26 = vector.shape_cast %25 : vector<128xf32> to vector<128x1xf32>
    %27 = arith.maximumf %24, %26 : vector<128x1xf32>
    %28 = vector.broadcast %27 : vector<128x1xf32> to vector<128x128xf32>
    %29 = arith.subf %16, %28 : vector<128x128xf32>
    %30 = math.exp %29 : vector<128x128xf32>
    %cst_11 = arith.constant 0.000000e+00 : f32
    %31 = vector.broadcast %cst_11 : f32 to vector<128x128xf32>
    %32 = arith.select %23, %31, %30 : vector<128x128xi1>, vector<128x128xf32>
    %c0_12 = arith.constant 0 : index
    %c0_13 = arith.constant 0 : index
    %33 = vector.load %arg10[%c0_12, %c0_13] : memref<128x1xf32, #tpu.memory_space<vmem>>, vector<128x1xf32>
    %34 = arith.subf %24, %27 : vector<128x1xf32>
    %35 = math.exp %34 : vector<128x1xf32>
    %36 = arith.mulf %33, %35 : vector<128x1xf32>
    %cst_14 = arith.constant dense<0.000000e+00> : vector<128xf32>
    %37 = vector.multi_reduction <add>, %32, %cst_14 [1] : vector<128x128xf32> to vector<128xf32>
    %38 = vector.shape_cast %37 : vector<128xf32> to vector<128x1xf32>
    %39 = arith.addf %36, %38 : vector<128x1xf32>
    %c0_15 = arith.constant 0 : index
    %c0_16 = arith.constant 0 : index
    %40 = vector.load %arg10[%c0_15, %c0_16] : memref<128x1xf32, #tpu.memory_space<vmem>>, vector<128x1xf32>
    tpu.vector_store %arg10[%c0_15, %c0_16], %39 {strides = array<i32>} : memref<128x1xf32, #tpu.memory_space<vmem>>, vector<128x1xf32>,
    %c0_17 = arith.constant 0 : index
    %c0_18 = arith.constant 0 : index
    %41 = vector.load %arg9[%c0_17, %c0_18] : memref<128x1xf32, #tpu.memory_space<vmem>>, vector<128x1xf32>
    tpu.vector_store %arg9[%c0_17, %c0_18], %27 {strides = array<i32>} : memref<128x1xf32, #tpu.memory_space<vmem>>, vector<128x1xf32>,
    %c0_19 = arith.constant 0 : index
    %c0_20 = arith.constant 0 : index
    %42 = vector.load %arg3[%c0_19, %c0_20] : memref<128x1xi32, #tpu.memory_space<vmem>>, vector<128x1xi32>
    %c0_21 = arith.constant 0 : index
    %c0_22 = arith.constant 0 : index
    %43 = vector.load %arg4[%c0_21, %c0_22] : memref<1x128xi32, #tpu.memory_space<vmem>>, vector<1x128xi32>
    %44 = vector.broadcast %42 : vector<128x1xi32> to vector<128x128xi32>
    %45 = vector.broadcast %43 : vector<1x128xi32> to vector<128x128xi32>
    %46 = arith.cmpi eq, %44, %45 : vector<128x128xi32>
    %c0_23 = arith.constant 0 : index
    %c0_24 = arith.constant 0 : index
    %47 = vector.load %arg11[%c0_23, %c0_24] : memref<128x1xf32, #tpu.memory_space<vmem>>, vector<128x1xf32>
    %48 = arith.xori %46, %23 : vector<128x128xi1>
    %cst_25 = arith.constant 0.000000e+00 : f32
    %49 = vector.broadcast %cst_25 : f32 to vector<128x128xf32>
    %50 = arith.select %48, %16, %49 : vector<128x128xi1>, vector<128x128xf32>
    %cst_26 = arith.constant dense<0.000000e+00> : vector<128xf32>
    %51 = vector.multi_reduction <add>, %50, %cst_26 [1] : vector<128x128xf32> to vector<128xf32>
    %52 = vector.shape_cast %51 : vector<128xf32> to vector<128x1xf32>
    %53 = arith.addf %47, %52 : vector<128x1xf32>
    %c0_27 = arith.constant 0 : index
    %c0_28 = arith.constant 0 : index
    %54 = vector.load %arg11[%c0_27, %c0_28] : memref<128x1xf32, #tpu.memory_space<vmem>>, vector<128x1xf32>
    tpu.vector_store %arg11[%c0_27, %c0_28], %53 {strides = array<i32>} : memref<128x1xf32, #tpu.memory_space<vmem>>, vector<128x1xf32>,
    %c0_i32_29 = arith.constant 0 : i32
    %55 = arith.cmpi eq, %arg1, %c0_i32_29 : i32
    %56 = arith.extui %55 : i1 to i32
    %c0_i32_30 = arith.constant 0 : i32
    %57 = arith.cmpi ne, %56, %c0_i32_30 : i32
    scf.if %57 {
      %c0_31 = arith.constant 0 : index
      %c0_32 = arith.constant 0 : index
      %58 = vector.load %arg9[%c0_31, %c0_32] : memref<128x1xf32, #tpu.memory_space<vmem>>, vector<128x1xf32>
      %c0_33 = arith.constant 0 : index
      %c0_34 = arith.constant 0 : index
      %59 = vector.load %arg10[%c0_33, %c0_34] : memref<128x1xf32, #tpu.memory_space<vmem>>, vector<128x1xf32>
      %60 = math.log %59 : vector<128x1xf32>
      %61 = arith.addf %58, %60 : vector<128x1xf32>
      %c0_35 = arith.constant 0 : index
      %c0_36 = arith.constant 0 : index
      %62 = vector.load %arg11[%c0_35, %c0_36] : memref<128x1xf32, #tpu.memory_space<vmem>>, vector<128x1xf32>
      %c0_37 = arith.constant 0 : index
      %c0_38 = arith.constant 0 : index
      %63 = vector.load %arg7[%c0_37, %c0_38] : memref<128x1xf32, #tpu.memory_space<vmem>>, vector<128x1xf32>
      %64 = arith.divf %62, %63 : vector<128x1xf32>
      %65 = arith.subf %64, %61 : vector<128x1xf32>
      %c16_i32 = arith.constant 16 : i32
      %66 = vector.broadcast %c16_i32 : i32 to vector<128x1xi32>
      %67 = arith.cmpi slt, %19, %66 : vector<128x1xi32>
      %cst_39 = arith.constant -1.000000e+00 : f32
      %68 = vector.broadcast %cst_39 : f32 to vector<128x1xf32>
      %69 = arith.mulf %68, %65 : vector<128x1xf32>
      %cst_40 = arith.constant 0.000000e+00 : f32
      %70 = vector.broadcast %cst_40 : f32 to vector<128x1xf32>
      %71 = arith.select %67, %69, %70 : vector<128x1xi1>, vector<128x1xf32>
      %c0_41 = arith.constant 0 : index
      %c0_42 = arith.constant 0 : index
      %72 = vector.load %arg8[%c0_41, %c0_42] : memref<128x1xf32, #tpu.memory_space<vmem>>, vector<128x1xf32>
      tpu.vector_store %arg8[%c0_41, %c0_42], %71 {strides = array<i32>} : memref<128x1xf32, #tpu.memory_space<vmem>>, vector<128x1xf32>,
    } else {
    }
    return
  }
  func.func @transform_0(%arg0: i32, %arg1: i32) -> (i32, i32) {
    %c0_i32 = arith.constant 0 : i32
    %c0_i32_0 = arith.constant 0 : i32
    %c0_i32_1 = arith.constant 0 : i32
    return %c0_i32, %c0_i32_0 : i32, i32
  }
  func.func @transform_1(%arg0: i32, %arg1: i32) -> (i32, i32) {
    %c0_i32 = arith.constant 0 : i32
    %c0_i32_0 = arith.constant 0 : i32
    return %arg0, %c0_i32 : i32, i32
  }
  func.func @transform_2(%arg0: i32, %arg1: i32) -> (i32, i32) {
    %c0_i32 = arith.constant 0 : i32
    %c0_i32_0 = arith.constant 0 : i32
    return %c0_i32, %arg1 : i32, i32
  }
  func.func @transform_3(%arg0: i32, %arg1: i32) -> (i32, i32) {
    %c0_i32 = arith.constant 0 : i32
    %c0_i32_0 = arith.constant 0 : i32
    return %c0_i32, %arg1 : i32, i32
  }
  func.func @transform_4(%arg0: i32, %arg1: i32) -> (i32, i32) {
    %c0_i32 = arith.constant 0 : i32
    %c0_i32_0 = arith.constant 0 : i32
    return %c0_i32, %arg1 : i32, i32
  }
  func.func @transform_5(%arg0: i32, %arg1: i32) -> (i32, i32) {
    %c0_i32 = arith.constant 0 : i32
    %c0_i32_0 = arith.constant 0 : i32
    return %arg0, %c0_i32 : i32, i32
  }
  func.func @transform_6(%arg0: i32, %arg1: i32) -> (i32, i32) {
    %c0_i32 = arith.constant 0 : i32
    %c0_i32_0 = arith.constant 0 : i32
    return %arg0, %c0_i32 : i32, i32
  }
}

module attributes {stable_mosaic.version = 11 : i64} {
  func.func @_supcon_kernel(%arg0: i32, %arg1: i32, %arg2: memref<128x128xf32, #tpu.memory_space<vmem>>, %arg3: memref<128x1xi32, #tpu.memory_space<vmem>>, %arg4: memref<1x128xi32, #tpu.memory_space<vmem>>, %arg5: memref<1x128xf32, #tpu.memory_space<vmem>>, %arg6: memref<1x128xi32, #tpu.memory_space<vmem>>, %arg7: memref<128x1xf32, #tpu.memory_space<vmem>>, %arg8: memref<128x1xf32, #tpu.memory_space<vmem>>, %arg9: memref<128x1xf32, #tpu.memory_space<vmem>>, %arg10: memref<128x1xf32, #tpu.memory_space<vmem>>, %arg11: memref<128x1xf32, #tpu.memory_space<vmem>>) attributes {dimension_semantics = [#tpu.dimension_semantics<parallel>, #tpu.dimension_semantics<arbitrary>], iteration_bounds = array<i64: 1, 1>, scalar_prefetch = 0 : i64, scratch_operands = 3 : i64, tpu.core_type = #tpu.core_type<tc>, window_params = [{pipeline_mode = #tpu.pipeline_mode<synchronous>, transform_indices = @transform_0, window_bounds = array<i64: 128, 128>}, {transform_indices = @transform_1, window_bounds = array<i64: 128, 1>}, {transform_indices = @transform_2, window_bounds = array<i64: 1, 128>}, {transform_indices = @transform_3, window_bounds = array<i64: 1, 128>}, {transform_indices = @transform_4, window_bounds = array<i64: 1, 128>}, {transform_indices = @transform_5, window_bounds = array<i64: 128, 1>}, {transform_indices = @transform_6, window_bounds = array<i64: 128, 1>}]} {
    %c0_i32 = arith.constant 0 : i32
    %0 = arith.cmpi eq, %arg1, %c0_i32 : i32
    %1 = arith.extui %0 : i1 to i32
    %c0_i32_0 = arith.constant 0 : i32
    %2 = arith.cmpi ne, %1, %c0_i32_0 : i32
    scf.if %2 {
      %cst_31 = arith.constant 0xFF800000 : f32
      %58 = vector.broadcast %cst_31 : f32 to vector<128x1xf32>
      %c0_32 = arith.constant 0 : index
      %c0_33 = arith.constant 0 : index
      %59 = vector.load %arg9[%c0_32, %c0_33] : memref<128x1xf32, #tpu.memory_space<vmem>>, vector<128x1xf32>
      tpu.vector_store %arg9[%c0_32, %c0_33], %58 {strides = array<i32>} : memref<128x1xf32, #tpu.memory_space<vmem>>, vector<128x1xf32>,
      %cst_34 = arith.constant 0.000000e+00 : f32
      %60 = vector.broadcast %cst_34 : f32 to vector<128x1xf32>
      %c0_35 = arith.constant 0 : index
      %c0_36 = arith.constant 0 : index
      %61 = vector.load %arg10[%c0_35, %c0_36] : memref<128x1xf32, #tpu.memory_space<vmem>>, vector<128x1xf32>
      tpu.vector_store %arg10[%c0_35, %c0_36], %60 {strides = array<i32>} : memref<128x1xf32, #tpu.memory_space<vmem>>, vector<128x1xf32>,
      %cst_37 = arith.constant 0.000000e+00 : f32
      %62 = vector.broadcast %cst_37 : f32 to vector<128x1xf32>
      %c0_38 = arith.constant 0 : index
      %c0_39 = arith.constant 0 : index
      %63 = vector.load %arg11[%c0_38, %c0_39] : memref<128x1xf32, #tpu.memory_space<vmem>>, vector<128x1xf32>
      tpu.vector_store %arg11[%c0_38, %c0_39], %62 {strides = array<i32>} : memref<128x1xf32, #tpu.memory_space<vmem>>, vector<128x1xf32>,
    } else {
    }
    %c128_i32 = arith.constant 128 : i32
    %3 = arith.muli %arg0, %c128_i32 : i32
    %4 = tpu.assume_multiple %3, 128 : i32
    %c128_i32_1 = arith.constant 128 : i32
    %5 = arith.muli %arg1, %c128_i32_1 : i32
    %6 = tpu.assume_multiple %5, 128 : i32
    %7 = arith.index_cast %4 : i32 to index
    %c0 = arith.constant 0 : index
    %8 = vector.load %arg2[%7, %c0] : memref<128x128xf32, #tpu.memory_space<vmem>>, vector<128x128xf32>
    %9 = arith.index_cast %6 : i32 to index
    %c0_2 = arith.constant 0 : index
    %10 = vector.load %arg2[%9, %c0_2] : memref<128x128xf32, #tpu.memory_space<vmem>>, vector<128x128xf32>
    %cst = arith.constant dense<0.000000e+00> : vector<128x128xf32>
    %11 = tpu.matmul %8, %10, %cst {dimension_numbers = #tpu.dot_dimension_numbers<[1], [1], [0], [0], [0, 0, 1, 0], [], []>} : vector<128x128xf32>, vector<128x128xf32>, vector<128x128xf32> -> vector<128x128xf32>
    %cst_3 = arith.constant 14.2857141 : f32
    %12 = vector.broadcast %cst_3 : f32 to vector<128x128xf32>
    %13 = arith.mulf %11, %12 : vector<128x128xf32>
    %c0_4 = arith.constant 0 : index
    %c0_5 = arith.constant 0 : index
    %14 = vector.load %arg5[%c0_4, %c0_5] : memref<1x128xf32, #tpu.memory_space<vmem>>, vector<1x128xf32>
    %15 = vector.broadcast %14 : vector<1x128xf32> to vector<128x128xf32>
    %16 = arith.addf %13, %15 : vector<128x128xf32>
    %17 = tpu.iota {dimensions = array<i32: 0>} : vector<128x1xi32>
    %18 = vector.broadcast %4 : i32 to vector<128x1xi32>
    %19 = arith.addi %18, %17 : vector<128x1xi32>
    %c0_6 = arith.constant 0 : index
    %c0_7 = arith.constant 0 : index
    %20 = vector.load %arg6[%c0_6, %c0_7] : memref<1x128xi32, #tpu.memory_space<vmem>>, vector<1x128xi32>
    %21 = vector.broadcast %20 : vector<1x128xi32> to vector<128x128xi32>
    %22 = vector.broadcast %19 : vector<128x1xi32> to vector<128x128xi32>
    %23 = arith.cmpi eq, %21, %22 : vector<128x128xi32>
    %c0_8 = arith.constant 0 : index
    %c0_9 = arith.constant 0 : index
    %24 = vector.load %arg9[%c0_8, %c0_9] : memref<128x1xf32, #tpu.memory_space<vmem>>, vector<128x1xf32>
    %cst_10 = arith.constant dense<0xFF800000> : vector<128xf32>
    %25 = vector.multi_reduction <maximumf>, %16, %cst_10 [1] : vector<128x128xf32> to vector<128xf32>
    %26 = vector.shape_cast %25 : vector<128xf32> to vector<128x1xf32>
    %27 = arith.maximumf %24, %26 : vector<128x1xf32>
    %28 = vector.broadcast %27 : vector<128x1xf32> to vector<128x128xf32>
    %29 = arith.subf %16, %28 : vector<128x128xf32>
    %30 = math.exp %29 : vector<128x128xf32>
    %cst_11 = arith.constant 0.000000e+00 : f32
    %31 = vector.broadcast %cst_11 : f32 to vector<128x128xf32>
    %32 = arith.select %23, %31, %30 : vector<128x128xi1>, vector<128x128xf32>
    %c0_12 = arith.constant 0 : index
    %c0_13 = arith.constant 0 : index
    %33 = vector.load %arg10[%c0_12, %c0_13] : memref<128x1xf32, #tpu.memory_space<vmem>>, vector<128x1xf32>
    %34 = arith.subf %24, %27 : vector<128x1xf32>
    %35 = math.exp %34 : vector<128x1xf32>
    %36 = arith.mulf %33, %35 : vector<128x1xf32>
    %cst_14 = arith.constant dense<0.000000e+00> : vector<128xf32>
    %37 = vector.multi_reduction <add>, %32, %cst_14 [1] : vector<128x128xf32> to vector<128xf32>
    %38 = vector.shape_cast %37 : vector<128xf32> to vector<128x1xf32>
    %39 = arith.addf %36, %38 : vector<128x1xf32>
    %c0_15 = arith.constant 0 : index
    %c0_16 = arith.constant 0 : index
    %40 = vector.load %arg10[%c0_15, %c0_16] : memref<128x1xf32, #tpu.memory_space<vmem>>, vector<128x1xf32>
    tpu.vector_store %arg10[%c0_15, %c0_16], %39 {strides = array<i32>} : memref<128x1xf32, #tpu.memory_space<vmem>>, vector<128x1xf32>,
    %c0_17 = arith.constant 0 : index
    %c0_18 = arith.constant 0 : index
    %41 = vector.load %arg9[%c0_17, %c0_18] : memref<128x1xf32, #tpu.memory_space<vmem>>, vector<128x1xf32>
    tpu.vector_store %arg9[%c0_17, %c0_18], %27 {strides = array<i32>} : memref<128x1xf32, #tpu.memory_space<vmem>>, vector<128x1xf32>,
    %c0_19 = arith.constant 0 : index
    %c0_20 = arith.constant 0 : index
    %42 = vector.load %arg3[%c0_19, %c0_20] : memref<128x1xi32, #tpu.memory_space<vmem>>, vector<128x1xi32>
    %c0_21 = arith.constant 0 : index
    %c0_22 = arith.constant 0 : index
    %43 = vector.load %arg4[%c0_21, %c0_22] : memref<1x128xi32, #tpu.memory_space<vmem>>, vector<1x128xi32>
    %44 = vector.broadcast %42 : vector<128x1xi32> to vector<128x128xi32>
    %45 = vector.broadcast %43 : vector<1x128xi32> to vector<128x128xi32>
    %46 = arith.cmpi eq, %44, %45 : vector<128x128xi32>
    %c0_23 = arith.constant 0 : index
    %c0_24 = arith.constant 0 : index
    %47 = vector.load %arg11[%c0_23, %c0_24] : memref<128x1xf32, #tpu.memory_space<vmem>>, vector<128x1xf32>
    %48 = arith.xori %46, %23 : vector<128x128xi1>
    %cst_25 = arith.constant 0.000000e+00 : f32
    %49 = vector.broadcast %cst_25 : f32 to vector<128x128xf32>
    %50 = arith.select %48, %16, %49 : vector<128x128xi1>, vector<128x128xf32>
    %cst_26 = arith.constant dense<0.000000e+00> : vector<128xf32>
    %51 = vector.multi_reduction <add>, %50, %cst_26 [1] : vector<128x128xf32> to vector<128xf32>
    %52 = vector.shape_cast %51 : vector<128xf32> to vector<128x1xf32>
    %53 = arith.addf %47, %52 : vector<128x1xf32>
    %c0_27 = arith.constant 0 : index
    %c0_28 = arith.constant 0 : index
    %54 = vector.load %arg11[%c0_27, %c0_28] : memref<128x1xf32, #tpu.memory_space<vmem>>, vector<128x1xf32>
    tpu.vector_store %arg11[%c0_27, %c0_28], %53 {strides = array<i32>} : memref<128x1xf32, #tpu.memory_space<vmem>>, vector<128x1xf32>,
    %c0_i32_29 = arith.constant 0 : i32
    %55 = arith.cmpi eq, %arg1, %c0_i32_29 : i32
    %56 = arith.extui %55 : i1 to i32
    %c0_i32_30 = arith.constant 0 : i32
    %57 = arith.cmpi ne, %56, %c0_i32_30 : i32
    scf.if %57 {
      %c0_31 = arith.constant 0 : index
      %c0_32 = arith.constant 0 : index
      %58 = vector.load %arg9[%c0_31, %c0_32] : memref<128x1xf32, #tpu.memory_space<vmem>>, vector<128x1xf32>
      %c0_33 = arith.constant 0 : index
      %c0_34 = arith.constant 0 : index
      %59 = vector.load %arg10[%c0_33, %c0_34] : memref<128x1xf32, #tpu.memory_space<vmem>>, vector<128x1xf32>
      %60 = math.log %59 : vector<128x1xf32>
      %61 = arith.addf %58, %60 : vector<128x1xf32>
      %c0_35 = arith.constant 0 : index
      %c0_36 = arith.constant 0 : index
      %62 = vector.load %arg11[%c0_35, %c0_36] : memref<128x1xf32, #tpu.memory_space<vmem>>, vector<128x1xf32>
      %c0_37 = arith.constant 0 : index
      %c0_38 = arith.constant 0 : index
      %63 = vector.load %arg7[%c0_37, %c0_38] : memref<128x1xf32, #tpu.memory_space<vmem>>, vector<128x1xf32>
      %64 = arith.divf %62, %63 : vector<128x1xf32>
      %65 = arith.subf %64, %61 : vector<128x1xf32>
      %c16_i32 = arith.constant 16 : i32
      %66 = vector.broadcast %c16_i32 : i32 to vector<128x1xi32>
      %67 = arith.cmpi slt, %19, %66 : vector<128x1xi32>
      %cst_39 = arith.constant -1.000000e+00 : f32
      %68 = vector.broadcast %cst_39 : f32 to vector<128x1xf32>
      %69 = arith.mulf %68, %65 : vector<128x1xf32>
      %cst_40 = arith.constant 0.000000e+00 : f32
      %70 = vector.broadcast %cst_40 : f32 to vector<128x1xf32>
      %71 = arith.select %67, %69, %70 : vector<128x1xi1>, vector<128x1xf32>
      %c0_41 = arith.constant 0 : index
      %c0_42 = arith.constant 0 : index
      %72 = vector.load %arg8[%c0_41, %c0_42] : memref<128x1xf32, #tpu.memory_space<vmem>>, vector<128x1xf32>
      tpu.vector_store %arg8[%c0_41, %c0_42], %71 {strides = array<i32>} : memref<128x1xf32, #tpu.memory_space<vmem>>, vector<128x1xf32>,
    } else {
    }
    return
  }
  func.func @transform_0(%arg0: i32, %arg1: i32) -> (i32, i32) {
    %c0_i32 = arith.constant 0 : i32
    %c0_i32_0 = arith.constant 0 : i32
    %c0_i32_1 = arith.constant 0 : i32
    return %c0_i32, %c0_i32_0 : i32, i32
  }
  func.func @transform_1(%arg0: i32, %arg1: i32) -> (i32, i32) {
    %c0_i32 = arith.constant 0 : i32
    %c0_i32_0 = arith.constant 0 : i32
    return %arg0, %c0_i32 : i32, i32
  }
  func.func @transform_2(%arg0: i32, %arg1: i32) -> (i32, i32) {
    %c0_i32 = arith.constant 0 : i32
    %c0_i32_0 = arith.constant 0 : i32
    return %c0_i32, %arg1 : i32, i32
  }
  func.func @transform_3(%arg0: i32, %arg1: i32) -> (i32, i32) {
    %c0_i32 = arith.constant 0 : i32
    %c0_i32_0 = arith.constant 0 : i32
    return %c0_i32, %arg1 : i32, i32
  }
  func.func @transform_4(%arg0: i32, %arg1: i32) -> (i32, i32) {
    %c0_i32 = arith.constant 0 : i32
    %c0_i32_0 = arith.constant 0 : i32
    return %c0_i32, %arg1 : i32, i32
  }
  func.func @transform_5(%arg0: i32, %arg1: i32) -> (i32, i32) {
    %c0_i32 = arith.constant 0 : i32
    %c0_i32_0 = arith.constant 0 : i32
    return %arg0, %c0_i32 : i32, i32
  }
  func.func @transform_6(%arg0: i32, %arg1: i32) -> (i32, i32) {
    %c0_i32 = arith.constant 0 : i32
    %c0_i32_0 = arith.constant 0 : i32
    return %arg0, %c0_i32 : i32, i32
  }
}

</mosaic_0001>

<llo_original>
// kernel: tpu_custom_call.1
$region0: #{tpu_custom_call.1}
  #allocation0 [shape = 'u32[]', space=smem, size = 0x4, offset = 0x4, fixed_abs, tag = 'smem constant byte address 0x4 - core index']
  #allocation1 [shape = 'u32[144,128]{1,0:T(1,128)}', space=vmem, size = 0x12000, scoped, tag = 'internal scratch']
  #allocation2 [shape = 'f32[128,1]{1,0:T(8,128)}', space=vmem, size = 0x10000, scoped, tag = 'scratch operand']
  #allocation3 [shape = 'f32[128,1]{1,0:T(8,128)}', space=vmem, size = 0x10000, scoped, tag = 'scratch operand']
  #allocation4 [shape = 'f32[128,1]{1,0:T(8,128)}', space=vmem, size = 0x10000, scoped, tag = 'scratch operand']
  %s0 = inlined_call_operand.vmem [shape: f32[128,128], index: 0, kind: input, shape index: {}]
  %s1 = inlined_call_operand.vmem [shape: s32[128,1], index: 1, kind: input, shape index: {}]
  %s2 = inlined_call_operand.vmem [shape: s32[1,128], index: 2, kind: input, shape index: {}]
  %s3 = inlined_call_operand.vmem [shape: f32[1,128], index: 3, kind: input, shape index: {}]
  %s4 = inlined_call_operand.vmem [shape: s32[1,128], index: 4, kind: input, shape index: {}]
  %s5 = inlined_call_operand.vmem [shape: f32[128,1], index: 5, kind: input, shape index: {}]
  %s6 = inlined_call_operand.vmem [shape: f32[128,1], index: 6, kind: output, shape index: {}]
  %s7 = sld [smem:[#allocation0]]
  $region42: #{tpu_custom_call.1} parent=0
    _
  %s9 = ssub.s32 1, %s7
  %s10 = scalar_select 0, %s9, %s7
  // Predicated region
  $region2: #{tpu_custom_call.1} parent=0 // pred_check
    _
  $region3: #{tpu_custom_call.1} parent=0 // pred_check_branch
    %12 = sbr.rel (0) target = $region5
  $region4: #{tpu_custom_call.1} parent=0 // pred_region
    _
  $region5: #{tpu_custom_call.1} parent=0 // pred_fallthru
    _
  // Predicated region
  $region6: #{tpu_custom_call.1} parent=0 // pred_check
    _
  $region7: #{tpu_custom_call.1} parent=0 // pred_check_branch
    %14 = sbr.rel (0) target = $region9
  $region8: #{tpu_custom_call.1} parent=0 // pred_region
    _
  $region9: #{tpu_custom_call.1} parent=0 // pred_fallthru
    _
  // Predicated region
  $region10: #{tpu_custom_call.1} parent=0 // pred_check
    _
  $region11: #{tpu_custom_call.1} parent=0 // pred_check_branch
    %16 = sbr.rel (0) target = $region13
  $region12: #{tpu_custom_call.1} parent=0 // pred_region
    _
  $region13: #{tpu_custom_call.1} parent=0 // pred_fallthru
    _
  // Predicated region
  $region14: #{tpu_custom_call.1} parent=0 // pred_check
    _
  $region15: #{tpu_custom_call.1} parent=0 // pred_check_branch
    %18 = sbr.rel (0) target = $region17
  $region16: #{tpu_custom_call.1} parent=0 // pred_region
    _
  $region17: #{tpu_custom_call.1} parent=0 // pred_fallthru
    _
  // Predicated region
  $region18: #{tpu_custom_call.1} parent=0 // pred_check
    _
  $region19: #{tpu_custom_call.1} parent=0 // pred_check_branch
    %20 = sbr.rel (0) target = $region21
  $region20: #{tpu_custom_call.1} parent=0 // pred_region
    _
  $region21: #{tpu_custom_call.1} parent=0 // pred_fallthru
    _
  // Predicated region
  $region22: #{tpu_custom_call.1} parent=0 // pred_check
    _
  $region23: #{tpu_custom_call.1} parent=0 // pred_check_branch
    %22 = sbr.rel (0) target = $region25
  $region24: #{tpu_custom_call.1} parent=0 // pred_region
    _
  $region25: #{tpu_custom_call.1} parent=0 // pred_fallthru
    _
  %p23 = scmp.eq.s32.totalorder 0, 0
  // Predicated region
  $region26: #{tpu_custom_call.1} parent=0 // pred_check
    %p24 = pneg %p23
  $region27: #{tpu_custom_call.1} parent=0 // pred_check_branch
    %26 = sbr.rel (%p24) target = $region29
  $region28: #{tpu_custom_call.1} parent=0 // pred_region
    %vm27 = vcmask 7168
    %28 = vst.msk [vmem:[#allocation2] sm:$0xff] %vm27, -inf
    %29 = vst.msk [vmem:[#allocation2 + $0x8] sm:$0xff] %vm27, -inf
    %30 = vst.msk [vmem:[#allocation2 + $0x10] sm:$0xff] %vm27, -inf
    %31 = vst.msk [vmem:[#allocation2 + $0x18] sm:$0xff] %vm27, -inf
    %32 = vst.msk [vmem:[#allocation2 + $0x20] sm:$0xff] %vm27, -inf
    %33 = vst.msk [vmem:[#allocation2 + $0x28] sm:$0xff] %vm27, -inf
    %34 = vst.msk [vmem:[#allocation2 + $0x30] sm:$0xff] %vm27, -inf
    %35 = vst.msk [vmem:[#allocation2 + $0x38] sm:$0xff] %vm27, -inf
    %36 = vst.msk [vmem:[#allocation2 + $0x40] sm:$0xff] %vm27, -inf
    %37 = vst.msk [vmem:[#allocation2 + $0x48] sm:$0xff] %vm27, -inf
    %38 = vst.msk [vmem:[#allocation2 + $0x50] sm:$0xff] %vm27, -inf
    %39 = vst.msk [vmem:[#allocation2 + $0x58] sm:$0xff] %vm27, -inf
    %40 = vst.msk [vmem:[#allocation2 + $0x60] sm:$0xff] %vm27, -inf
    %41 = vst.msk [vmem:[#allocation2 + $0x68] sm:$0xff] %vm27, -inf
    %42 = vst.msk [vmem:[#allocation2 + $0x70] sm:$0xff] %vm27, -inf
    %43 = vst.msk [vmem:[#allocation2 + $0x78] sm:$0xff] %vm27, -inf
    %44 = vst.msk [vmem:[#allocation3] sm:$0xff] %vm27, 0.0
    %45 = vst.msk [vmem:[#allocation3 + $0x8] sm:$0xff] %vm27, 0.0
    %46 = vst.msk [vmem:[#allocation3 + $0x10] sm:$0xff] %vm27, 0.0
    %47 = vst.msk [vmem:[#allocation3 + $0x18] sm:$0xff] %vm27, 0.0
    %48 = vst.msk [vmem:[#allocation3 + $0x20] sm:$0xff] %vm27, 0.0
    %49 = vst.msk [vmem:[#allocation3 + $0x28] sm:$0xff] %vm27, 0.0
    %50 = vst.msk [vmem:[#allocation3 + $0x30] sm:$0xff] %vm27, 0.0
    %51 = vst.msk [vmem:[#allocation3 + $0x38] sm:$0xff] %vm27, 0.0
    %52 = vst.msk [vmem:[#allocation3 + $0x40] sm:$0xff] %vm27, 0.0
    %53 = vst.msk [vmem:[#allocation3 + $0x48] sm:$0xff] %vm27, 0.0
    %54 = vst.msk [vmem:[#allocation3 + $0x50] sm:$0xff] %vm27, 0.0
    %55 = vst.msk [vmem:[#allocation3 + $0x58] sm:$0xff] %vm27, 0.0
    %56 = vst.msk [vmem:[#allocation3 + $0x60] sm:$0xff] %vm27, 0.0
    %57 = vst.msk [vmem:[#allocation3 + $0x68] sm:$0xff] %vm27, 0.0
    %58 = vst.msk [vmem:[#allocation3 + $0x70] sm:$0xff] %vm27, 0.0
    %59 = vst.msk [vmem:[#allocation3 + $0x78] sm:$0xff] %vm27, 0.0
    %60 = vst.msk [vmem:[#allocation4] sm:$0xff] %vm27, 0.0
    %61 = vst.msk [vmem:[#allocation4 + $0x8] sm:$0xff] %vm27, 0.0
    %62 = vst.msk [vmem:[#allocation4 + $0x10] sm:$0xff] %vm27, 0.0
    %63 = vst.msk [vmem:[#allocation4 + $0x18] sm:$0xff] %vm27, 0.0
    %64 = vst.msk [vmem:[#allocation4 + $0x20] sm:$0xff] %vm27, 0.0
    %65 = vst.msk [vmem:[#allocation4 + $0x28] sm:$0xff] %vm27, 0.0
    %66 = vst.msk [vmem:[#allocation4 + $0x30] sm:$0xff] %vm27, 0.0
    %67 = vst.msk [vmem:[#allocation4 + $0x38] sm:$0xff] %vm27, 0.0
    %68 = vst.msk [vmem:[#allocation4 + $0x40] sm:$0xff] %vm27, 0.0
    %69 = vst.msk [vmem:[#allocation4 + $0x48] sm:$0xff] %vm27, 0.0
    %70 = vst.msk [vmem:[#allocation4 + $0x50] sm:$0xff] %vm27, 0.0
    %71 = vst.msk [vmem:[#allocation4 + $0x58] sm:$0xff] %vm27, 0.0
    %72 = vst.msk [vmem:[#allocation4 + $0x60] sm:$0xff] %vm27, 0.0
    %73 = vst.msk [vmem:[#allocation4 + $0x68] sm:$0xff] %vm27, 0.0
    %74 = vst.msk [vmem:[#allocation4 + $0x70] sm:$0xff] %vm27, 0.0
    %75 = vst.msk [vmem:[#allocation4 + $0x78] sm:$0xff] %vm27, 0.0
  $region29: #{tpu_custom_call.1} parent=0 // pred_fallthru
    _
  %s76 = smul.u32 0, 128
  %s77 = smul.u32 0, 128
  %s78 = scalar_lea.vmem %s0, %s76
  %v79 = vld [vmem:[%s78] sm:$0xff]
  %v80 = vld [vmem:[%s78 + $0x8] sm:$0xff]
  %v81 = vld [vmem:[%s78 + $0x10] sm:$0xff]
  %v82 = vld [vmem:[%s78 + $0x18] sm:$0xff]
  %v83 = vld [vmem:[%s78 + $0x20] sm:$0xff]
  %v84 = vld [vmem:[%s78 + $0x28] sm:$0xff]
  %v85 = vld [vmem:[%s78 + $0x30] sm:$0xff]
  %v86 = vld [vmem:[%s78 + $0x38] sm:$0xff]
  %v87 = vld [vmem:[%s78 + $0x40] sm:$0xff]
  %v88 = vld [vmem:[%s78 + $0x48] sm:$0xff]
  %v89 = vld [vmem:[%s78 + $0x50] sm:$0xff]
  %v90 = vld [vmem:[%s78 + $0x58] sm:$0xff]
  %v91 = vld [vmem:[%s78 + $0x60] sm:$0xff]
  %v92 = vld [vmem:[%s78 + $0x68] sm:$0xff]
  %v93 = vld [vmem:[%s78 + $0x70] sm:$0xff]
  %v94 = vld [vmem:[%s78 + $0x78] sm:$0xff]
  %s95 = scalar_lea.vmem %s0, %s77
  %v96 = vld [vmem:[%s95] sm:$0xff]
  %v97 = vld [vmem:[%s95 + $0x8] sm:$0xff]
  %v98 = vld [vmem:[%s95 + $0x10] sm:$0xff]
  %v99 = vld [vmem:[%s95 + $0x18] sm:$0xff]
  %v100 = vld [vmem:[%s95 + $0x20] sm:$0xff]
  %v101 = vld [vmem:[%s95 + $0x28] sm:$0xff]
  %v102 = vld [vmem:[%s95 + $0x30] sm:$0xff]
  %v103 = vld [vmem:[%s95 + $0x38] sm:$0xff]
  %v104 = vld [vmem:[%s95 + $0x40] sm:$0xff]
  %v105 = vld [vmem:[%s95 + $0x48] sm:$0xff]
  %v106 = vld [vmem:[%s95 + $0x50] sm:$0xff]
  %v107 = vld [vmem:[%s95 + $0x58] sm:$0xff]
  %v108 = vld [vmem:[%s95 + $0x60] sm:$0xff]
  %v109 = vld [vmem:[%s95 + $0x68] sm:$0xff]
  %v110 = vld [vmem:[%s95 + $0x70] sm:$0xff]
  %v111 = vld [vmem:[%s95 + $0x78] sm:$0xff]
  %112 = vmatprep.subr.mxu0 0.0
  %113 = vmatpush1.xpose.msra.mxu0 %v96
  %114 = vmatprep.subr.mxu0 0.0
  %115 = vmatpush1.xpose.msra.mxu0 %v97
  %116 = vmatprep.subr.mxu0 0.0
  %117 = vmatpush1.xpose.msra.mxu0 %v98
  %118 = vmatprep.subr.mxu0 0.0
  %119 = vmatpush1.xpose.msra.mxu0 %v99
  %120 = vmatprep.subr.mxu0 0.0
  %121 = vmatpush1.xpose.msra.mxu0 %v100
  %122 = vmatprep.subr.mxu0 0.0
  %123 = vmatpush1.xpose.msra.mxu0 %v101
  %124 = vmatprep.subr.mxu0 0.0
  %125 = vmatpush1.xpose.msra.mxu0 %v102
  %126 = vmatprep.subr.mxu0 0.0
  %127 = vmatpush1.xpose.msra.mxu0 %v103
  %128 = vmatprep.subr.mxu0 0.0
  %129 = vmatpush1.xpose.msra.mxu0 %v104
  %130 = vmatprep.subr.mxu0 0.0
  %131 = vmatpush1.xpose.msra.mxu0 %v105
  %132 = vmatprep.subr.mxu0 0.0
  %133 = vmatpush1.xpose.msra.mxu0 %v106
  %134 = vmatprep.subr.mxu0 0.0
  %135 = vmatpush1.xpose.msra.mxu0 %v107
  %136 = vmatprep.subr.mxu0 0.0
  %137 = vmatpush1.xpose.msra.mxu0 %v108
  %138 = vmatprep.subr.mxu0 0.0
  %139 = vmatpush1.xpose.msra.mxu0 %v109
  %140 = vmatprep.subr.mxu0 0.0
  %141 = vmatpush1.xpose.msra.mxu0 %v110
  %142 = vmatprep.subr.mxu0 0.0
  %143 = vmatpush1.xpose.msra.mxu0 %v111
  %144 = vmatprep.subr.mxu0 0.0
  %145 = vmatpush1.xpose.msra.mxu0 0.0
  %146 = vmatprep.subr.mxu0 0.0
  %147 = vmatpush1.xpose.msra.mxu0 0.0
  %148 = vmatprep.subr.mxu0 0.0
  %149 = vmatpush1.xpose.msra.mxu0 0.0
  %150 = vmatprep.subr.mxu0 0.0
  %151 = vmatpush1.xpose.msra.mxu0 0.0
  %152 = vmatprep.subr.mxu0 0.0
  %153 = vmatpush1.xpose.msra.mxu0 0.0
  %154 = vmatprep.subr.mxu0 0.0
  %155 = vmatpush1.xpose.msra.mxu0 0.0
  %156 = vmatprep.subr.mxu0 0.0
  %157 = vmatpush1.xpose.msra.mxu0 0.0
  %158 = vmatprep.subr.mxu0 0.0
  %159 = vmatpush1.xpose.msra.mxu0 0.0
  %160 = vmatprep.subr.mxu0 0.0
  %161 = vmatpush1.xpose.msra.mxu0 0.0
  %162 = vmatprep.subr.mxu0 0.0
  %163 = vmatpush1.xpose.msra.mxu0 0.0
  %164 = vmatprep.subr.mxu0 0.0
  %165 = vmatpush1.xpose.msra.mxu0 0.0
  %166 = vmatprep.subr.mxu0 0.0
  %167 = vmatpush1.xpose.msra.mxu0 0.0
  %168 = vmatprep.subr.mxu0 0.0
  %169 = vmatpush1.xpose.msra.mxu0 0.0
  %170 = vmatprep.subr.mxu0 0.0
  %171 = vmatpush1.xpose.msra.mxu0 0.0
  %172 = vmatprep.subr.mxu0 0.0
  %173 = vmatpush1.xpose.msra.mxu0 0.0
  %174 = vmatprep.subr.mxu0 0.0
  %175 = vmatpush1.xpose.msra.mxu0 0.0
  %176 = vmatprep.mubr.f32.mxu0 0.0
  %177 = vmatmul.mubr.f32.gmra.mrb[0].mxu0 %v79
  %v178 = vpop.f32.mrb[0].mxu0
  %v179 = vadd.f32 0.0, %v178
  %v180 = vpop.f32.mrb[0].mxu0
  %181 = vmatprep.mubr.f32.mxu0 0.0
  %182 = vmatmul.mubr.f32.gmra.mrb[0].mxu0 %v80
  %v183 = vpop.f32.mrb[0].mxu0
  %v184 = vadd.f32 0.0, %v183
  %v185 = vpop.f32.mrb[0].mxu0
  %186 = vmatprep.mubr.f32.mxu0 0.0
  %187 = vmatmul.mubr.f32.gmra.mrb[0].mxu0 %v81
  %v188 = vpop.f32.mrb[0].mxu0
  %v189 = vadd.f32 0.0, %v188
  %v190 = vpop.f32.mrb[0].mxu0
  %191 = vmatprep.mubr.f32.mxu0 0.0
  %192 = vmatmul.mubr.f32.gmra.mrb[0].mxu0 %v82
  %v193 = vpop.f32.mrb[0].mxu0
  %v194 = vadd.f32 0.0, %v193
  %v195 = vpop.f32.mrb[0].mxu0
  %196 = vmatprep.mubr.f32.mxu0 0.0
  %197 = vmatmul.mubr.f32.gmra.mrb[0].mxu0 %v83
  %v198 = vpop.f32.mrb[0].mxu0
  %v199 = vadd.f32 0.0, %v198
  %v200 = vpop.f32.mrb[0].mxu0
  %201 = vmatprep.mubr.f32.mxu0 0.0
  %202 = vmatmul.mubr.f32.gmra.mrb[0].mxu0 %v84
  %v203 = vpop.f32.mrb[0].mxu0
  %v204 = vadd.f32 0.0, %v203
  %v205 = vpop.f32.mrb[0].mxu0
  %206 = vmatprep.mubr.f32.mxu0 0.0
  %207 = vmatmul.mubr.f32.gmra.mrb[0].mxu0 %v85
  %v208 = vpop.f32.mrb[0].mxu0
  %v209 = vadd.f32 0.0, %v208
  %v210 = vpop.f32.mrb[0].mxu0
  %211 = vmatprep.mubr.f32.mxu0 0.0
  %212 = vmatmul.mubr.f32.gmra.mrb[0].mxu0 %v86
  %v213 = vpop.f32.mrb[0].mxu0
  %v214 = vadd.f32 0.0, %v213
  %v215 = vpop.f32.mrb[0].mxu0
  %216 = vmatprep.mubr.f32.mxu0 0.0
  %217 = vmatmul.mubr.f32.gmra.mrb[0].mxu0 %v87
  %v218 = vpop.f32.mrb[0].mxu0
  %v219 = vadd.f32 0.0, %v218
  %v220 = vpop.f32.mrb[0].mxu0
  %221 = vmatprep.mubr.f32.mxu0 0.0
  %222 = vmatmul.mubr.f32.gmra.mrb[0].mxu0 %v88
  %v223 = vpop.f32.mrb[0].mxu0
  %v224 = vadd.f32 0.0, %v223
  %v225 = vpop.f32.mrb[0].mxu0
  %226 = vmatprep.mubr.f32.mxu0 0.0
  %227 = vmatmul.mubr.f32.gmra.mrb[0].mxu0 %v89
  %v228 = vpop.f32.mrb[0].mxu0
  %v229 = vadd.f32 0.0, %v228
  %v230 = vpop.f32.mrb[0].mxu0
  %231 = vmatprep.mubr.f32.mxu0 0.0
  %232 = vmatmul.mubr.f32.gmra.mrb[0].mxu0 %v90
  %v233 = vpop.f32.mrb[0].mxu0
  %v234 = vadd.f32 0.0, %v233
  %v235 = vpop.f32.mrb[0].mxu0
  %236 = vmatprep.mubr.f32.mxu0 0.0
  %237 = vmatmul.mubr.f32.gmra.mrb[0].mxu0 %v91
  %v238 = vpop.f32.mrb[0].mxu0
  %v239 = vadd.f32 0.0, %v238
  %v240 = vpop.f32.mrb[0].mxu0
  %241 = vmatprep.mubr.f32.mxu0 0.0
  %242 = vmatmul.mubr.f32.gmra.mrb[0].mxu0 %v92
  %v243 = vpop.f32.mrb[0].mxu0
  %v244 = vadd.f32 0.0, %v243
  %v245 = vpop.f32.mrb[0].mxu0
  %246 = vmatprep.mubr.f32.mxu0 0.0
  %247 = vmatmul.mubr.f32.gmra.mrb[0].mxu0 %v93
  %v248 = vpop.f32.mrb[0].mxu0
  %v249 = vadd.f32 0.0, %v248
  %v250 = vpop.f32.mrb[0].mxu0
  %251 = vmatprep.mubr.f32.mxu0 0.0
  %252 = vmatmul.mubr.f32.gmra.mrb[0].mxu0 %v94
  %v253 = vpop.f32.mrb[0].mxu0
  %v254 = vadd.f32 0.0, %v253
  %v255 = vpop.f32.mrb[0].mxu0
  %256 = vdwg.mxu0
  %v257 = vmul.f32 %v179, 14.285714
  %v258 = vmul.f32 %v184, 14.285714
  %v259 = vmul.f32 %v189, 14.285714
  %v260 = vmul.f32 %v194, 14.285714
  %v261 = vmul.f32 %v199, 14.285714
  %v262 = vmul.f32 %v204, 14.285714
  %v263 = vmul.f32 %v209, 14.285714
  %v264 = vmul.f32 %v214, 14.285714
  %v265 = vmul.f32 %v219, 14.285714
  %v266 = vmul.f32 %v224, 14.285714
  %v267 = vmul.f32 %v229, 14.285714
  %v268 = vmul.f32 %v234, 14.285714
  %v269 = vmul.f32 %v239, 14.285714
  %v270 = vmul.f32 %v244, 14.285714
  %v271 = vmul.f32 %v249, 14.285714
  %v272 = vmul.f32 %v254, 14.285714
  %v273 = vld [vmem:[%s3] sm:$0x1]
  %v275 = vlaneseq
  %v276 = vshrl.u32 %v275, 7
  %v277 = vsub.s32 0, %v276
  %v278 = vrot.slane %v273, %v277
  %v280 = vadd.f32 %v257, %v278
  %v281 = vadd.f32 %v258, %v278
  %v282 = vadd.f32 %v259, %v278
  %v283 = vadd.f32 %v260, %v278
  %v284 = vadd.f32 %v261, %v278
  %v285 = vadd.f32 %v262, %v278
  %v286 = vadd.f32 %v263, %v278
  %v287 = vadd.f32 %v264, %v278
  %v288 = vadd.f32 %v265, %v278
  %v289 = vadd.f32 %v266, %v278
  %v290 = vadd.f32 %v267, %v278
  %v291 = vadd.f32 %v268, %v278
  %v292 = vadd.f32 %v269, %v278
  %v293 = vadd.f32 %v270, %v278
  %v294 = vadd.f32 %v271, %v278
  %v295 = vadd.f32 %v272, %v278
  %v296 = vlaneseq
  %v297 = vshrl.u32 %v296, 7
  %v298 = vadd.s32 %v297, 8
  %v299 = vadd.s32 %v297, 16
  %v300 = vadd.s32 %v297, 24
  %v301 = vadd.s32 %v297, 32
  %v302 = vadd.s32 %v297, 40
  %v303 = vadd.s32 %v297, 48
  %v304 = vadd.s32 %v297, 56
  %v305 = vadd.s32 %v297, 64
  %v306 = vadd.s32 %v297, 72
  %v307 = vadd.s32 %v297, 80
  %v308 = vadd.s32 %v297, 88
  %v309 = vadd.s32 %v297, 96
  %v310 = vadd.s32 %v297, 104
  %v311 = vadd.s32 %v297, 112
  %v312 = vadd.s32 %v297, 120
  %v313 = vstv %s76
  %v314 = vadd.s32 %v313, %v297
  %v315 = vadd.s32 %v313, %v298
  %v316 = vadd.s32 %v313, %v299
  %v317 = vadd.s32 %v313, %v300
  %v318 = vadd.s32 %v313, %v301
  %v319 = vadd.s32 %v313, %v302
  %v320 = vadd.s32 %v313, %v303
  %v321 = vadd.s32 %v313, %v304
  %v322 = vadd.s32 %v313, %v305
  %v323 = vadd.s32 %v313, %v306
  %v324 = vadd.s32 %v313, %v307
  %v325 = vadd.s32 %v313, %v308
  %v326 = vadd.s32 %v313, %v309
  %v327 = vadd.s32 %v313, %v310
  %v328 = vadd.s32 %v313, %v311
  %v329 = vadd.s32 %v313, %v312
  %v330 = vld [vmem:[%s4] sm:$0x1]
  %v331 = vlaneseq
  %v332 = vshrl.u32 %v331, 7
  %v333 = vsub.s32 0, %v332
  %v334 = vrot.slane %v330, %v333
  %vm335 = vcmp.eq.s32.totalorder %v334, %v314
  %vm336 = vcmp.eq.s32.totalorder %v334, %v315
  %vm337 = vcmp.eq.s32.totalorder %v334, %v316
  %vm338 = vcmp.eq.s32.totalorder %v334, %v317
  %vm339 = vcmp.eq.s32.totalorder %v334, %v318
  %vm340 = vcmp.eq.s32.totalorder %v334, %v319
  %vm341 = vcmp.eq.s32.totalorder %v334, %v320
  %vm342 = vcmp.eq.s32.totalorder %v334, %v321
  %vm343 = vcmp.eq.s32.totalorder %v334, %v322
  %vm344 = vcmp.eq.s32.totalorder %v334, %v323
  %vm345 = vcmp.eq.s32.totalorder %v334, %v324
  %vm346 = vcmp.eq.s32.totalorder %v334, %v325
  %vm347 = vcmp.eq.s32.totalorder %v334, %v326
  %vm348 = vcmp.eq.s32.totalorder %v334, %v327
  %vm349 = vcmp.eq.s32.totalorder %v334, %v328
  %vm350 = vcmp.eq.s32.totalorder %v334, %v329
  %v351 = vld [vmem:[#allocation2] sm:$0xff]
  %v352 = vld [vmem:[#allocation2 + $0x8] sm:$0xff]
  %v353 = vld [vmem:[#allocation2 + $0x10] sm:$0xff]
  %v354 = vld [vmem:[#allocation2 + $0x18] sm:$0xff]
  %v355 = vld [vmem:[#allocation2 + $0x20] sm:$0xff]
  %v356 = vld [vmem:[#allocation2 + $0x28] sm:$0xff]
  %v357 = vld [vmem:[#allocation2 + $0x30] sm:$0xff]
  %v358 = vld [vmem:[#allocation2 + $0x38] sm:$0xff]
  %v359 = vld [vmem:[#allocation2 + $0x40] sm:$0xff]
  %v360 = vld [vmem:[#allocation2 + $0x48] sm:$0xff]
  %v361 = vld [vmem:[#allocation2 + $0x50] sm:$0xff]
  %v362 = vld [vmem:[#allocation2 + $0x58] sm:$0xff]
  %v363 = vld [vmem:[#allocation2 + $0x60] sm:$0xff]
  %v364 = vld [vmem:[#allocation2 + $0x68] sm:$0xff]
  %v365 = vld [vmem:[#allocation2 + $0x70] sm:$0xff]
  %v366 = vld [vmem:[#allocation2 + $0x78] sm:$0xff]
  %367 = vmax.xlane.f32.xlu0 %v280
  %v368 = vpop.xlane.xlu0 %367
  %369 = vmax.xlane.f32.xlu0 %v281
  %v370 = vpop.xlane.xlu0 %369
  %371 = vmax.xlane.f32.xlu0 %v282
  %v372 = vpop.xlane.xlu0 %371
  %373 = vmax.xlane.f32.xlu0 %v283
  %v374 = vpop.xlane.xlu0 %373
  %375 = vmax.xlane.f32.xlu0 %v284
  %v376 = vpop.xlane.xlu0 %375
  %377 = vmax.xlane.f32.xlu0 %v285
  %v378 = vpop.xlane.xlu0 %377
  %379 = vmax.xlane.f32.xlu0 %v286
  %v380 = vpop.xlane.xlu0 %379
  %381 = vmax.xlane.f32.xlu0 %v287
  %v382 = vpop.xlane.xlu0 %381
  %383 = vmax.xlane.f32.xlu0 %v288
  %v384 = vpop.xlane.xlu0 %383
  %385 = vmax.xlane.f32.xlu0 %v289
  %v386 = vpop.xlane.xlu0 %385
  %387 = vmax.xlane.f32.xlu0 %v290
  %v388 = vpop.xlane.xlu0 %387
  %389 = vmax.xlane.f32.xlu0 %v291
  %v390 = vpop.xlane.xlu0 %389
  %391 = vmax.xlane.f32.xlu0 %v292
  %v392 = vpop.xlane.xlu0 %391
  %393 = vmax.xlane.f32.xlu0 %v293
  %v394 = vpop.xlane.xlu0 %393
  %395 = vmax.xlane.f32.xlu0 %v294
  %v396 = vpop.xlane.xlu0 %395
  %397 = vmax.xlane.f32.xlu0 %v295
  %v398 = vpop.xlane.xlu0 %397
  %v399 = vmax.f32 %v351, %v368
  %v400 = vmax.f32 %v352, %v370
  %v401 = vmax.f32 %v353, %v372
  %v402 = vmax.f32 %v354, %v374
  %v403 = vmax.f32 %v355, %v376
  %v404 = vmax.f32 %v356, %v378
  %v405 = vmax.f32 %v357, %v380
  %v406 = vmax.f32 %v358, %v382
  %v407 = vmax.f32 %v359, %v384
  %v408 = vmax.f32 %v360, %v386
  %v409 = vmax.f32 %v361, %v388
  %v410 = vmax.f32 %v362, %v390
  %v411 = vmax.f32 %v363, %v392
  %v412 = vmax.f32 %v364, %v394
  %v413 = vmax.f32 %v365, %v396
  %v414 = vmax.f32 %v366, %v398
  %416 = vset.pattern.permute.xlu0 0
  %417 = vperm.xlu0 %416, %v399
  %v418 = vpop.permute.xlu0 %417
  %421 = vset.pattern.permute.xlu0 0
  %422 = vperm.xlu0 %421, %v400
  %v423 = vpop.permute.xlu0 %422
  %426 = vset.pattern.permute.xlu0 0
  %427 = vperm.xlu0 %426, %v401
  %v428 = vpop.permute.xlu0 %427
  %431 = vset.pattern.permute.xlu0 0
  %432 = vperm.xlu0 %431, %v402
  %v433 = vpop.permute.xlu0 %432
  %436 = vset.pattern.permute.xlu0 0
  %437 = vperm.xlu0 %436, %v403
  %v438 = vpop.permute.xlu0 %437
  %441 = vset.pattern.permute.xlu0 0
  %442 = vperm.xlu0 %441, %v404
  %v443 = vpop.permute.xlu0 %442
  %446 = vset.pattern.permute.xlu0 0
  %447 = vperm.xlu0 %446, %v405
  %v448 = vpop.permute.xlu0 %447
  %451 = vset.pattern.permute.xlu0 0
  %452 = vperm.xlu0 %451, %v406
  %v453 = vpop.permute.xlu0 %452
  %456 = vset.pattern.permute.xlu0 0
  %457 = vperm.xlu0 %456, %v407
  %v458 = vpop.permute.xlu0 %457
  %461 = vset.pattern.permute.xlu0 0
  %462 = vperm.xlu0 %461, %v408
  %v463 = vpop.permute.xlu0 %462
  %466 = vset.pattern.permute.xlu0 0
  %467 = vperm.xlu0 %466, %v409
  %v468 = vpop.permute.xlu0 %467
  %471 = vset.pattern.permute.xlu0 0
  %472 = vperm.xlu0 %471, %v410
  %v473 = vpop.permute.xlu0 %472
  %476 = vset.pattern.permute.xlu0 0
  %477 = vperm.xlu0 %476, %v411
  %v478 = vpop.permute.xlu0 %477
  %481 = vset.pattern.permute.xlu0 0
  %482 = vperm.xlu0 %481, %v412
  %v483 = vpop.permute.xlu0 %482
  %486 = vset.pattern.permute.xlu0 0
  %487 = vperm.xlu0 %486, %v413
  %v488 = vpop.permute.xlu0 %487
  %491 = vset.pattern.permute.xlu0 0
  %492 = vperm.xlu0 %491, %v414
  %v493 = vpop.permute.xlu0 %492
  %v495 = vsub.f32 %v280, %v418
  %v496 = vsub.f32 %v281, %v423
  %v497 = vsub.f32 %v282, %v428
  %v498 = vsub.f32 %v283, %v433
  %v499 = vsub.f32 %v284, %v438
  %v500 = vsub.f32 %v285, %v443
  %v501 = vsub.f32 %v286, %v448
  %v502 = vsub.f32 %v287, %v453
  %v503 = vsub.f32 %v288, %v458
  %v504 = vsub.f32 %v289, %v463
  %v505 = vsub.f32 %v290, %v468
  %v506 = vsub.f32 %v291, %v473
  %v507 = vsub.f32 %v292, %v478
  %v508 = vsub.f32 %v293, %v483
  %v509 = vsub.f32 %v294, %v488
  %v510 = vsub.f32 %v295, %v493
  %v511 = vmul.f32 %v495, 1.442695
  %v512 = vpow.pop %v511
  %v513 = vmul.f32 %v496, 1.442695
  %v514 = vpow.pop %v513
  %v515 = vmul.f32 %v497, 1.442695
  %v516 = vpow.pop %v515
  %v517 = vmul.f32 %v498, 1.442695
  %v518 = vpow.pop %v517
  %v519 = vmul.f32 %v499, 1.442695
  %v520 = vpow.pop %v519
  %v521 = vmul.f32 %v500, 1.442695
  %v522 = vpow.pop %v521
  %v523 = vmul.f32 %v501, 1.442695
  %v524 = vpow.pop %v523
  %v525 = vmul.f32 %v502, 1.442695
  %v526 = vpow.pop %v525
  %v527 = vmul.f32 %v503, 1.442695
  %v528 = vpow.pop %v527
  %v529 = vmul.f32 %v504, 1.442695
  %v530 = vpow.pop %v529
  %v531 = vmul.f32 %v505, 1.442695
  %v532 = vpow.pop %v531
  %v533 = vmul.f32 %v506, 1.442695
  %v534 = vpow.pop %v533
  %v535 = vmul.f32 %v507, 1.442695
  %v536 = vpow.pop %v535
  %v537 = vmul.f32 %v508, 1.442695
  %v538 = vpow.pop %v537
  %v539 = vmul.f32 %v509, 1.442695
  %v540 = vpow.pop %v539
  %v541 = vmul.f32 %v510, 1.442695
  %v542 = vpow.pop %v541
  %v543 = vsel %vm335, 0.0, %v512
  %v544 = vsel %vm336, 0.0, %v514
  %v545 = vsel %vm337, 0.0, %v516
  %v546 = vsel %vm338, 0.0, %v518
  %v547 = vsel %vm339, 0.0, %v520
  %v548 = vsel %vm340, 0.0, %v522
  %v549 = vsel %vm341, 0.0, %v524
  %v550 = vsel %vm342, 0.0, %v526
  %v551 = vsel %vm343, 0.0, %v528
  %v552 = vsel %vm344, 0.0, %v530
  %v553 = vsel %vm345, 0.0, %v532
  %v554 = vsel %vm346, 0.0, %v534
  %v555 = vsel %vm347, 0.0, %v536
  %v556 = vsel %vm348, 0.0, %v538
  %v557 = vsel %vm349, 0.0, %v540
  %v558 = vsel %vm350, 0.0, %v542
  %v559 = vld [vmem:[#allocation3] sm:$0xff]
  %v560 = vld [vmem:[#allocation3 + $0x8] sm:$0xff]
  %v561 = vld [vmem:[#allocation3 + $0x10] sm:$0xff]
  %v562 = vld [vmem:[#allocation3 + $0x18] sm:$0xff]
  %v563 = vld [vmem:[#allocation3 + $0x20] sm:$0xff]
  %v564 = vld [vmem:[#allocation3 + $0x28] sm:$0xff]
  %v565 = vld [vmem:[#allocation3 + $0x30] sm:$0xff]
  %v566 = vld [vmem:[#allocation3 + $0x38] sm:$0xff]
  %v567 = vld [vmem:[#allocation3 + $0x40] sm:$0xff]
  %v568 = vld [vmem:[#allocation3 + $0x48] sm:$0xff]
  %v569 = vld [vmem:[#allocation3 + $0x50] sm:$0xff]
  %v570 = vld [vmem:[#allocation3 + $0x58] sm:$0xff]
  %v571 = vld [vmem:[#allocation3 + $0x60] sm:$0xff]
  %v572 = vld [vmem:[#allocation3 + $0x68] sm:$0xff]
  %v573 = vld [vmem:[#allocation3 + $0x70] sm:$0xff]
  %v574 = vld [vmem:[#allocation3 + $0x78] sm:$0xff]
  %v575 = vsub.f32 %v351, %v399
  %v576 = vsub.f32 %v352, %v400
  %v577 = vsub.f32 %v353, %v401
  %v578 = vsub.f32 %v354, %v402
  %v579 = vsub.f32 %v355, %v403
  %v580 = vsub.f32 %v356, %v404
  %v581 = vsub.f32 %v357, %v405
  %v582 = vsub.f32 %v358, %v406
  %v583 = vsub.f32 %v359, %v407
  %v584 = vsub.f32 %v360, %v408
  %v585 = vsub.f32 %v361, %v409
  %v586 = vsub.f32 %v362, %v410
  %v587 = vsub.f32 %v363, %v411
  %v588 = vsub.f32 %v364, %v412
  %v589 = vsub.f32 %v365, %v413
  %v590 = vsub.f32 %v366, %v414
  %v591 = vmul.f32 %v575, 1.442695
  %v592 = vpow.pop %v591
  %v593 = vmul.f32 %v576, 1.442695
  %v594 = vpow.pop %v593
  %v595 = vmul.f32 %v577, 1.442695
  %v596 = vpow.pop %v595
  %v597 = vmul.f32 %v578, 1.442695
  %v598 = vpow.pop %v597
  %v599 = vmul.f32 %v579, 1.442695
  %v600 = vpow.pop %v599
  %v601 = vmul.f32 %v580, 1.442695
  %v602 = vpow.pop %v601
  %v603 = vmul.f32 %v581, 1.442695
  %v604 = vpow.pop %v603
  %v605 = vmul.f32 %v582, 1.442695
  %v606 = vpow.pop %v605
  %v607 = vmul.f32 %v583, 1.442695
  %v608 = vpow.pop %v607
  %v609 = vmul.f32 %v584, 1.442695
  %v610 = vpow.pop %v609
  %v611 = vmul.f32 %v585, 1.442695
  %v612 = vpow.pop %v611
  %v613 = vmul.f32 %v586, 1.442695
  %v614 = vpow.pop %v613
  %v615 = vmul.f32 %v587, 1.442695
  %v616 = vpow.pop %v615
  %v617 = vmul.f32 %v588, 1.442695
  %v618 = vpow.pop %v617
  %v619 = vmul.f32 %v589, 1.442695
  %v620 = vpow.pop %v619
  %v621 = vmul.f32 %v590, 1.442695
  %v622 = vpow.pop %v621
  %v623 = vmul.f32 %v559, %v592
  %v624 = vmul.f32 %v560, %v594
  %v625 = vmul.f32 %v561, %v596
  %v626 = vmul.f32 %v562, %v598
  %v627 = vmul.f32 %v563, %v600
  %v628 = vmul.f32 %v564, %v602
  %v629 = vmul.f32 %v565, %v604
  %v630 = vmul.f32 %v566, %v606
  %v631 = vmul.f32 %v567, %v608
  %v632 = vmul.f32 %v568, %v610
  %v633 = vmul.f32 %v569, %v612
  %v634 = vmul.f32 %v570, %v614
  %v635 = vmul.f32 %v571, %v616
  %v636 = vmul.f32 %v572, %v618
  %v637 = vmul.f32 %v573, %v620
  %v638 = vmul.f32 %v574, %v622
  %639 = vadd.xlane.f32.xlu0 %v543
  %v640 = vpop.xlane.xlu0 %639
  %641 = vadd.xlane.f32.xlu0 %v544
  %v642 = vpop.xlane.xlu0 %641
  %643 = vadd.xlane.f32.xlu0 %v545
  %v644 = vpop.xlane.xlu0 %643
  %645 = vadd.xlane.f32.xlu0 %v546
  %v646 = vpop.xlane.xlu0 %645
  %647 = vadd.xlane.f32.xlu0 %v547
  %v648 = vpop.xlane.xlu0 %647
  %649 = vadd.xlane.f32.xlu0 %v548
  %v650 = vpop.xlane.xlu0 %649
  %651 = vadd.xlane.f32.xlu0 %v549
  %v652 = vpop.xlane.xlu0 %651
  %653 = vadd.xlane.f32.xlu0 %v550
  %v654 = vpop.xlane.xlu0 %653
  %655 = vadd.xlane.f32.xlu0 %v551
  %v656 = vpop.xlane.xlu0 %655
  %657 = vadd.xlane.f32.xlu0 %v552
  %v658 = vpop.xlane.xlu0 %657
  %659 = vadd.xlane.f32.xlu0 %v553
  %v660 = vpop.xlane.xlu0 %659
  %661 = vadd.xlane.f32.xlu0 %v554
  %v662 = vpop.xlane.xlu0 %661
  %663 = vadd.xlane.f32.xlu0 %v555
  %v664 = vpop.xlane.xlu0 %663
  %665 = vadd.xlane.f32.xlu0 %v556
  %v666 = vpop.xlane.xlu0 %665
  %667 = vadd.xlane.f32.xlu0 %v557
  %v668 = vpop.xlane.xlu0 %667
  %669 = vadd.xlane.f32.xlu0 %v558
  %v670 = vpop.xlane.xlu0 %669
  %v671 = vadd.f32 %v623, %v640
  %v672 = vadd.f32 %v624, %v642
  %v673 = vadd.f32 %v625, %v644
  %v674 = vadd.f32 %v626, %v646
  %v675 = vadd.f32 %v627, %v648
  %v676 = vadd.f32 %v628, %v650
  %v677 = vadd.f32 %v629, %v652
  %v678 = vadd.f32 %v630, %v654
  %v679 = vadd.f32 %v631, %v656
  %v680 = vadd.f32 %v632, %v658
  %v681 = vadd.f32 %v633, %v660
  %v682 = vadd.f32 %v634, %v662
  %v683 = vadd.f32 %v635, %v664
  %v684 = vadd.f32 %v636, %v666
  %v685 = vadd.f32 %v637, %v668
  %v686 = vadd.f32 %v638, %v670
  %vm687 = vcmask 7168
  %688 = vst.msk [vmem:[#allocation3] sm:$0xff] %vm687, %v671
  %689 = vst.msk [vmem:[#allocation3 + $0x8] sm:$0xff] %vm687, %v672
  %690 = vst.msk [vmem:[#allocation3 + $0x10] sm:$0xff] %vm687, %v673
  %691 = vst.msk [vmem:[#allocation3 + $0x18] sm:$0xff] %vm687, %v674
  %692 = vst.msk [vmem:[#allocation3 + $0x20] sm:$0xff] %vm687, %v675
  %693 = vst.msk [vmem:[#allocation3 + $0x28] sm:$0xff] %vm687, %v676
  %694 = vst.msk [vmem:[#allocation3 + $0x30] sm:$0xff] %vm687, %v677
  %695 = vst.msk [vmem:[#allocation3 + $0x38] sm:$0xff] %vm687, %v678
  %696 = vst.msk [vmem:[#allocation3 + $0x40] sm:$0xff] %vm687, %v679
  %697 = vst.msk [vmem:[#allocation3 + $0x48] sm:$0xff] %vm687, %v680
  %698 = vst.msk [vmem:[#allocation3 + $0x50] sm:$0xff] %vm687, %v681
  %699 = vst.msk [vmem:[#allocation3 + $0x58] sm:$0xff] %vm687, %v682
  %700 = vst.msk [vmem:[#allocation3 + $0x60] sm:$0xff] %vm687, %v683
  %701 = vst.msk [vmem:[#allocation3 + $0x68] sm:$0xff] %vm687, %v684
  %702 = vst.msk [vmem:[#allocation3 + $0x70] sm:$0xff] %vm687, %v685
  %703 = vst.msk [vmem:[#allocation3 + $0x78] sm:$0xff] %vm687, %v686
  %704 = vst.msk [vmem:[#allocation2] sm:$0xff] %vm687, %v399
  %705 = vst.msk [vmem:[#allocation2 + $0x8] sm:$0xff] %vm687, %v400
  %706 = vst.msk [vmem:[#allocation2 + $0x10] sm:$0xff] %vm687, %v401
  %707 = vst.msk [vmem:[#allocation2 + $0x18] sm:$0xff] %vm687, %v402
  %708 = vst.msk [vmem:[#allocation2 + $0x20] sm:$0xff] %vm687, %v403
  %709 = vst.msk [vmem:[#allocation2 + $0x28] sm:$0xff] %vm687, %v404
  %710 = vst.msk [vmem:[#allocation2 + $0x30] sm:$0xff] %vm687, %v405
  %711 = vst.msk [vmem:[#allocation2 + $0x38] sm:$0xff] %vm687, %v406
  %712 = vst.msk [vmem:[#allocation2 + $0x40] sm:$0xff] %vm687, %v407
  %713 = vst.msk [vmem:[#allocation2 + $0x48] sm:$0xff] %vm687, %v408
  %714 = vst.msk [vmem:[#allocation2 + $0x50] sm:$0xff] %vm687, %v409
  %715 = vst.msk [vmem:[#allocation2 + $0x58] sm:$0xff] %vm687, %v410
  %716 = vst.msk [vmem:[#allocation2 + $0x60] sm:$0xff] %vm687, %v411
  %717 = vst.msk [vmem:[#allocation2 + $0x68] sm:$0xff] %vm687, %v412
  %718 = vst.msk [vmem:[#allocation2 + $0x70] sm:$0xff] %vm687, %v413
  %719 = vst.msk [vmem:[#allocation2 + $0x78] sm:$0xff] %vm687, %v414
  %v720 = vld [vmem:[%s1] sm:$0xff]
  %v721 = vld [vmem:[%s1 + $0x8] sm:$0xff]
  %v722 = vld [vmem:[%s1 + $0x10] sm:$0xff]
  %v723 = vld [vmem:[%s1 + $0x18] sm:$0xff]
  %v724 = vld [vmem:[%s1 + $0x20] sm:$0xff]
  %v725 = vld [vmem:[%s1 + $0x28] sm:$0xff]
  %v726 = vld [vmem:[%s1 + $0x30] sm:$0xff]
  %v727 = vld [vmem:[%s1 + $0x38] sm:$0xff]
  %v728 = vld [vmem:[%s1 + $0x40] sm:$0xff]
  %v729 = vld [vmem:[%s1 + $0x48] sm:$0xff]
  %v730 = vld [vmem:[%s1 + $0x50] sm:$0xff]
  %v731 = vld [vmem:[%s1 + $0x58] sm:$0xff]
  %v732 = vld [vmem:[%s1 + $0x60] sm:$0xff]
  %v733 = vld [vmem:[%s1 + $0x68] sm:$0xff]
  %v734 = vld [vmem:[%s1 + $0x70] sm:$0xff]
  %v735 = vld [vmem:[%s1 + $0x78] sm:$0xff]
  %v736 = vld [vmem:[%s2] sm:$0x1]
  %737 = vset.pattern.permute.xlu0 0
  %738 = vperm.xlu0 %737, %v720
  %v739 = vpop.permute.xlu0 %738
  %740 = vset.pattern.permute.xlu0 0
  %741 = vperm.xlu0 %740, %v721
  %v742 = vpop.permute.xlu0 %741
  %743 = vset.pattern.permute.xlu0 0
  %744 = vperm.xlu0 %743, %v722
  %v745 = vpop.permute.xlu0 %744
  %746 = vset.pattern.permute.xlu0 0
  %747 = vperm.xlu0 %746, %v723
  %v748 = vpop.permute.xlu0 %747
  %749 = vset.pattern.permute.xlu0 0
  %750 = vperm.xlu0 %749, %v724
  %v751 = vpop.permute.xlu0 %750
  %752 = vset.pattern.permute.xlu0 0
  %753 = vperm.xlu0 %752, %v725
  %v754 = vpop.permute.xlu0 %753
  %755 = vset.pattern.permute.xlu0 0
  %756 = vperm.xlu0 %755, %v726
  %v757 = vpop.permute.xlu0 %756
  %758 = vset.pattern.permute.xlu0 0
  %759 = vperm.xlu0 %758, %v727
  %v760 = vpop.permute.xlu0 %759
  %761 = vset.pattern.permute.xlu0 0
  %762 = vperm.xlu0 %761, %v728
  %v763 = vpop.permute.xlu0 %762
  %764 = vset.pattern.permute.xlu0 0
  %765 = vperm.xlu0 %764, %v729
  %v766 = vpop.permute.xlu0 %765
  %767 = vset.pattern.permute.xlu0 0
  %768 = vperm.xlu0 %767, %v730
  %v769 = vpop.permute.xlu0 %768
  %770 = vset.pattern.permute.xlu0 0
  %771 = vperm.xlu0 %770, %v731
  %v772 = vpop.permute.xlu0 %771
  %773 = vset.pattern.permute.xlu0 0
  %774 = vperm.xlu0 %773, %v732
  %v775 = vpop.permute.xlu0 %774
  %776 = vset.pattern.permute.xlu0 0
  %777 = vperm.xlu0 %776, %v733
  %v778 = vpop.permute.xlu0 %777
  %779 = vset.pattern.permute.xlu0 0
  %780 = vperm.xlu0 %779, %v734
  %v781 = vpop.permute.xlu0 %780
  %782 = vset.pattern.permute.xlu0 0
  %783 = vperm.xlu0 %782, %v735
  %v784 = vpop.permute.xlu0 %783
  %v785 = vlaneseq
  %v786 = vshrl.u32 %v785, 7
  %v787 = vsub.s32 0, %v786
  %v788 = vrot.slane %v736, %v787
  %vm789 = vcmp.eq.s32.totalorder %v739, %v788
  %vm790 = vcmp.eq.s32.totalorder %v742, %v788
  %vm791 = vcmp.eq.s32.totalorder %v745, %v788
  %vm792 = vcmp.eq.s32.totalorder %v748, %v788
  %vm793 = vcmp.eq.s32.totalorder %v751, %v788
  %vm794 = vcmp.eq.s32.totalorder %v754, %v788
  %vm795 = vcmp.eq.s32.totalorder %v757, %v788
  %vm796 = vcmp.eq.s32.totalorder %v760, %v788
  %vm797 = vcmp.eq.s32.totalorder %v763, %v788
  %vm798 = vcmp.eq.s32.totalorder %v766, %v788
  %vm799 = vcmp.eq.s32.totalorder %v769, %v788
  %vm800 = vcmp.eq.s32.totalorder %v772, %v788
  %vm801 = vcmp.eq.s32.totalorder %v775, %v788
  %vm802 = vcmp.eq.s32.totalorder %v778, %v788
  %vm803 = vcmp.eq.s32.totalorder %v781, %v788
  %vm804 = vcmp.eq.s32.totalorder %v784, %v788
  %v805 = vld [vmem:[#allocation4] sm:$0xff]
  %v806 = vld [vmem:[#allocation4 + $0x8] sm:$0xff]
  %v807 = vld [vmem:[#allocation4 + $0x10] sm:$0xff]
  %v808 = vld [vmem:[#allocation4 + $0x18] sm:$0xff]
  %v809 = vld [vmem:[#allocation4 + $0x20] sm:$0xff]
  %v810 = vld [vmem:[#allocation4 + $0x28] sm:$0xff]
  %v811 = vld [vmem:[#allocation4 + $0x30] sm:$0xff]
  %v812 = vld [vmem:[#allocation4 + $0x38] sm:$0xff]
  %v813 = vld [vmem:[#allocation4 + $0x40] sm:$0xff]
  %v814 = vld [vmem:[#allocation4 + $0x48] sm:$0xff]
  %v815 = vld [vmem:[#allocation4 + $0x50] sm:$0xff]
  %v816 = vld [vmem:[#allocation4 + $0x58] sm:$0xff]
  %v817 = vld [vmem:[#allocation4 + $0x60] sm:$0xff]
  %v818 = vld [vmem:[#allocation4 + $0x68] sm:$0xff]
  %v819 = vld [vmem:[#allocation4 + $0x70] sm:$0xff]
  %v820 = vld [vmem:[#allocation4 + $0x78] sm:$0xff]
  %vm821 = vmxor %vm789, %vm335
  %vm822 = vmxor %vm790, %vm336
  %vm823 = vmxor %vm791, %vm337
  %vm824 = vmxor %vm792, %vm338
  %vm825 = vmxor %vm793, %vm339
  %vm826 = vmxor %vm794, %vm340
  %vm827 = vmxor %vm795, %vm341
  %vm828 = vmxor %vm796, %vm342
  %vm829 = vmxor %vm797, %vm343
  %vm830 = vmxor %vm798, %vm344
  %vm831 = vmxor %vm799, %vm345
  %vm832 = vmxor %vm800, %vm346
  %vm833 = vmxor %vm801, %vm347
  %vm834 = vmxor %vm802, %vm348
  %vm835 = vmxor %vm803, %vm349
  %vm836 = vmxor %vm804, %vm350
  %v837 = vsel %vm821, %v280, 0.0
  %v838 = vsel %vm822, %v281, 0.0
  %v839 = vsel %vm823, %v282, 0.0
  %v840 = vsel %vm824, %v283, 0.0
  %v841 = vsel %vm825, %v284, 0.0
  %v842 = vsel %vm826, %v285, 0.0
  %v843 = vsel %vm827, %v286, 0.0
  %v844 = vsel %vm828, %v287, 0.0
  %v845 = vsel %vm829, %v288, 0.0
  %v846 = vsel %vm830, %v289, 0.0
  %v847 = vsel %vm831, %v290, 0.0
  %v848 = vsel %vm832, %v291, 0.0
  %v849 = vsel %vm833, %v292, 0.0
  %v850 = vsel %vm834, %v293, 0.0
  %v851 = vsel %vm835, %v294, 0.0
  %v852 = vsel %vm836, %v295, 0.0
  %853 = vadd.xlane.f32.xlu0 %v837
  %v854 = vpop.xlane.xlu0 %853
  %855 = vadd.xlane.f32.xlu0 %v838
  %v856 = vpop.xlane.xlu0 %855
  %857 = vadd.xlane.f32.xlu0 %v839
  %v858 = vpop.xlane.xlu0 %857
  %859 = vadd.xlane.f32.xlu0 %v840
  %v860 = vpop.xlane.xlu0 %859
  %861 = vadd.xlane.f32.xlu0 %v841
  %v862 = vpop.xlane.xlu0 %861
  %863 = vadd.xlane.f32.xlu0 %v842
  %v864 = vpop.xlane.xlu0 %863
  %865 = vadd.xlane.f32.xlu0 %v843
  %v866 = vpop.xlane.xlu0 %865
  %867 = vadd.xlane.f32.xlu0 %v844
  %v868 = vpop.xlane.xlu0 %867
  %869 = vadd.xlane.f32.xlu0 %v845
  %v870 = vpop.xlane.xlu0 %869
  %871 = vadd.xlane.f32.xlu0 %v846
  %v872 = vpop.xlane.xlu0 %871
  %873 = vadd.xlane.f32.xlu0 %v847
  %v874 = vpop.xlane.xlu0 %873
  %875 = vadd.xlane.f32.xlu0 %v848
  %v876 = vpop.xlane.xlu0 %875
  %877 = vadd.xlane.f32.xlu0 %v849
  %v878 = vpop.xlane.xlu0 %877
  %879 = vadd.xlane.f32.xlu0 %v850
  %v880 = vpop.xlane.xlu0 %879
  %881 = vadd.xlane.f32.xlu0 %v851
  %v882 = vpop.xlane.xlu0 %881
  %883 = vadd.xlane.f32.xlu0 %v852
  %v884 = vpop.xlane.xlu0 %883
  %v885 = vadd.f32 %v805, %v854
  %v886 = vadd.f32 %v806, %v856
  %v887 = vadd.f32 %v807, %v858
  %v888 = vadd.f32 %v808, %v860
  %v889 = vadd.f32 %v809, %v862
  %v890 = vadd.f32 %v810, %v864
  %v891 = vadd.f32 %v811, %v866
  %v892 = vadd.f32 %v812, %v868
  %v893 = vadd.f32 %v813, %v870
  %v894 = vadd.f32 %v814, %v872
  %v895 = vadd.f32 %v815, %v874
  %v896 = vadd.f32 %v816, %v876
  %v897 = vadd.f32 %v817, %v878
  %v898 = vadd.f32 %v818, %v880
  %v899 = vadd.f32 %v819, %v882
  %v900 = vadd.f32 %v820, %v884
  %901 = vst.msk [vmem:[#allocation4] sm:$0xff] %vm687, %v885
  %902 = vst.msk [vmem:[#allocation4 + $0x8] sm:$0xff] %vm687, %v886
  %903 = vst.msk [vmem:[#allocation4 + $0x10] sm:$0xff] %vm687, %v887
  %904 = vst.msk [vmem:[#allocation4 + $0x18] sm:$0xff] %vm687, %v888
  %905 = vst.msk [vmem:[#allocation4 + $0x20] sm:$0xff] %vm687, %v889
  %906 = vst.msk [vmem:[#allocation4 + $0x28] sm:$0xff] %vm687, %v890
  %907 = vst.msk [vmem:[#allocation4 + $0x30] sm:$0xff] %vm687, %v891
  %908 = vst.msk [vmem:[#allocation4 + $0x38] sm:$0xff] %vm687, %v892
  %909 = vst.msk [vmem:[#allocation4 + $0x40] sm:$0xff] %vm687, %v893
  %910 = vst.msk [vmem:[#allocation4 + $0x48] sm:$0xff] %vm687, %v894
  %911 = vst.msk [vmem:[#allocation4 + $0x50] sm:$0xff] %vm687, %v895
  %912 = vst.msk [vmem:[#allocation4 + $0x58] sm:$0xff] %vm687, %v896
  %913 = vst.msk [vmem:[#allocation4 + $0x60] sm:$0xff] %vm687, %v897
  %914 = vst.msk [vmem:[#allocation4 + $0x68] sm:$0xff] %vm687, %v898
  %915 = vst.msk [vmem:[#allocation4 + $0x70] sm:$0xff] %vm687, %v899
  %916 = vst.msk [vmem:[#allocation4 + $0x78] sm:$0xff] %vm687, %v900
  // Predicated region
  $region30: #{tpu_custom_call.1} parent=0 // pred_check
    %p917 = pneg %p23
  $region31: #{tpu_custom_call.1} parent=0 // pred_check_branch
    %919 = sbr.rel (%p917) target = $region33
  $region32: #{tpu_custom_call.1} parent=0 // pred_region
    %v920 = vld [vmem:[#allocation2] sm:$0xff]
    %v921 = vld [vmem:[#allocation2 + $0x8] sm:$0xff]
    %v922 = vld [vmem:[#allocation2 + $0x10] sm:$0xff]
    %v923 = vld [vmem:[#allocation2 + $0x18] sm:$0xff]
    %v924 = vld [vmem:[#allocation2 + $0x20] sm:$0xff]
    %v925 = vld [vmem:[#allocation2 + $0x28] sm:$0xff]
    %v926 = vld [vmem:[#allocation2 + $0x30] sm:$0xff]
    %v927 = vld [vmem:[#allocation2 + $0x38] sm:$0xff]
    %v928 = vld [vmem:[#allocation2 + $0x40] sm:$0xff]
    %v929 = vld [vmem:[#allocation2 + $0x48] sm:$0xff]
    %v930 = vld [vmem:[#allocation2 + $0x50] sm:$0xff]
    %v931 = vld [vmem:[#allocation2 + $0x58] sm:$0xff]
    %v932 = vld [vmem:[#allocation2 + $0x60] sm:$0xff]
    %v933 = vld [vmem:[#allocation2 + $0x68] sm:$0xff]
    %v934 = vld [vmem:[#allocation2 + $0x70] sm:$0xff]
    %v935 = vld [vmem:[#allocation2 + $0x78] sm:$0xff]
    %v936 = vld [vmem:[#allocation3] sm:$0xff]
    %v937 = vld [vmem:[#allocation3 + $0x8] sm:$0xff]
    %v938 = vld [vmem:[#allocation3 + $0x10] sm:$0xff]
    %v939 = vld [vmem:[#allocation3 + $0x18] sm:$0xff]
    %v940 = vld [vmem:[#allocation3 + $0x20] sm:$0xff]
    %v941 = vld [vmem:[#allocation3 + $0x28] sm:$0xff]
    %v942 = vld [vmem:[#allocation3 + $0x30] sm:$0xff]
    %v943 = vld [vmem:[#allocation3 + $0x38] sm:$0xff]
    %v944 = vld [vmem:[#allocation3 + $0x40] sm:$0xff]
    %v945 = vld [vmem:[#allocation3 + $0x48] sm:$0xff]
    %v946 = vld [vmem:[#allocation3 + $0x50] sm:$0xff]
    %v947 = vld [vmem:[#allocation3 + $0x58] sm:$0xff]
    %v948 = vld [vmem:[#allocation3 + $0x60] sm:$0xff]
    %v949 = vld [vmem:[#allocation3 + $0x68] sm:$0xff]
    %v950 = vld [vmem:[#allocation3 + $0x70] sm:$0xff]
    %v951 = vld [vmem:[#allocation3 + $0x78] sm:$0xff]
    %v952 = vlog2.pop %v936
    %v953 = vmul.f32 %v952, 0.6931472
    %v954 = vlog2.pop %v937
    %v955 = vmul.f32 %v954, 0.6931472
    %v956 = vlog2.pop %v938
    %v957 = vmul.f32 %v956, 0.6931472
    %v958 = vlog2.pop %v939
    %v959 = vmul.f32 %v958, 0.6931472
    %v960 = vlog2.pop %v940
    %v961 = vmul.f32 %v960, 0.6931472
    %v962 = vlog2.pop %v941
    %v963 = vmul.f32 %v962, 0.6931472
    %v964 = vlog2.pop %v942
    %v965 = vmul.f32 %v964, 0.6931472
    %v966 = vlog2.pop %v943
    %v967 = vmul.f32 %v966, 0.6931472
    %v968 = vlog2.pop %v944
    %v969 = vmul.f32 %v968, 0.6931472
    %v970 = vlog2.pop %v945
    %v971 = vmul.f32 %v970, 0.6931472
    %v972 = vlog2.pop %v946
    %v973 = vmul.f32 %v972, 0.6931472
    %v974 = vlog2.pop %v947
    %v975 = vmul.f32 %v974, 0.6931472
    %v976 = vlog2.pop %v948
    %v977 = vmul.f32 %v976, 0.6931472
    %v978 = vlog2.pop %v949
    %v979 = vmul.f32 %v978, 0.6931472
    %v980 = vlog2.pop %v950
    %v981 = vmul.f32 %v980, 0.6931472
    %v982 = vlog2.pop %v951
    %v983 = vmul.f32 %v982, 0.6931472
    %v984 = vadd.f32 %v920, %v953
    %v985 = vadd.f32 %v921, %v955
    %v986 = vadd.f32 %v922, %v957
    %v987 = vadd.f32 %v923, %v959
    %v988 = vadd.f32 %v924, %v961
    %v989 = vadd.f32 %v925, %v963
    %v990 = vadd.f32 %v926, %v965
    %v991 = vadd.f32 %v927, %v967
    %v992 = vadd.f32 %v928, %v969
    %v993 = vadd.f32 %v929, %v971
    %v994 = vadd.f32 %v930, %v973
    %v995 = vadd.f32 %v931, %v975
    %v996 = vadd.f32 %v932, %v977
    %v997 = vadd.f32 %v933, %v979
    %v998 = vadd.f32 %v934, %v981
    %v999 = vadd.f32 %v935, %v983
    %v1000 = vld [vmem:[#allocation4] sm:$0xff]
    %v1001 = vld [vmem:[#allocation4 + $0x8] sm:$0xff]
    %v1002 = vld [vmem:[#allocation4 + $0x10] sm:$0xff]
    %v1003 = vld [vmem:[#allocation4 + $0x18] sm:$0xff]
    %v1004 = vld [vmem:[#allocation4 + $0x20] sm:$0xff]
    %v1005 = vld [vmem:[#allocation4 + $0x28] sm:$0xff]
    %v1006 = vld [vmem:[#allocation4 + $0x30] sm:$0xff]
    %v1007 = vld [vmem:[#allocation4 + $0x38] sm:$0xff]
    %v1008 = vld [vmem:[#allocation4 + $0x40] sm:$0xff]
    %v1009 = vld [vmem:[#allocation4 + $0x48] sm:$0xff]
    %v1010 = vld [vmem:[#allocation4 + $0x50] sm:$0xff]
    %v1011 = vld [vmem:[#allocation4 + $0x58] sm:$0xff]
    %v1012 = vld [vmem:[#allocation4 + $0x60] sm:$0xff]
    %v1013 = vld [vmem:[#allocation4 + $0x68] sm:$0xff]
    %v1014 = vld [vmem:[#allocation4 + $0x70] sm:$0xff]
    %v1015 = vld [vmem:[#allocation4 + $0x78] sm:$0xff]
    %v1016 = vld [vmem:[%s5] sm:$0xff]
    %v1017 = vld [vmem:[%s5 + $0x8] sm:$0xff]
    %v1018 = vld [vmem:[%s5 + $0x10] sm:$0xff]
    %v1019 = vld [vmem:[%s5 + $0x18] sm:$0xff]
    %v1020 = vld [vmem:[%s5 + $0x20] sm:$0xff]
    %v1021 = vld [vmem:[%s5 + $0x28] sm:$0xff]
    %v1022 = vld [vmem:[%s5 + $0x30] sm:$0xff]
    %v1023 = vld [vmem:[%s5 + $0x38] sm:$0xff]
    %v1024 = vld [vmem:[%s5 + $0x40] sm:$0xff]
    %v1025 = vld [vmem:[%s5 + $0x48] sm:$0xff]
    %v1026 = vld [vmem:[%s5 + $0x50] sm:$0xff]
    %v1027 = vld [vmem:[%s5 + $0x58] sm:$0xff]
    %v1028 = vld [vmem:[%s5 + $0x60] sm:$0xff]
    %v1029 = vld [vmem:[%s5 + $0x68] sm:$0xff]
    %v1030 = vld [vmem:[%s5 + $0x70] sm:$0xff]
    %v1031 = vld [vmem:[%s5 + $0x78] sm:$0xff]
    %v1032 = vrcp.pop %v1016
    %v1033 = vmul.f32 %v1000, %v1032
    %v1034 = vrcp.pop %v1017
    %v1035 = vmul.f32 %v1001, %v1034
    %v1036 = vrcp.pop %v1018
    %v1037 = vmul.f32 %v1002, %v1036
    %v1038 = vrcp.pop %v1019
    %v1039 = vmul.f32 %v1003, %v1038
    %v1040 = vrcp.pop %v1020
    %v1041 = vmul.f32 %v1004, %v1040
    %v1042 = vrcp.pop %v1021
    %v1043 = vmul.f32 %v1005, %v1042
    %v1044 = vrcp.pop %v1022
    %v1045 = vmul.f32 %v1006, %v1044
    %v1046 = vrcp.pop %v1023
    %v1047 = vmul.f32 %v1007, %v1046
    %v1048 = vrcp.pop %v1024
    %v1049 = vmul.f32 %v1008, %v1048
    %v1050 = vrcp.pop %v1025
    %v1051 = vmul.f32 %v1009, %v1050
    %v1052 = vrcp.pop %v1026
    %v1053 = vmul.f32 %v1010, %v1052
    %v1054 = vrcp.pop %v1027
    %v1055 = vmul.f32 %v1011, %v1054
    %v1056 = vrcp.pop %v1028
    %v1057 = vmul.f32 %v1012, %v1056
    %v1058 = vrcp.pop %v1029
    %v1059 = vmul.f32 %v1013, %v1058
    %v1060 = vrcp.pop %v1030
    %v1061 = vmul.f32 %v1014, %v1060
    %v1062 = vrcp.pop %v1031
    %v1063 = vmul.f32 %v1015, %v1062
    %v1064 = vsub.f32 %v1033, %v984
    %v1065 = vsub.f32 %v1035, %v985
    %v1066 = vsub.f32 %v1037, %v986
    %v1067 = vsub.f32 %v1039, %v987
    %v1068 = vsub.f32 %v1041, %v988
    %v1069 = vsub.f32 %v1043, %v989
    %v1070 = vsub.f32 %v1045, %v990
    %v1071 = vsub.f32 %v1047, %v991
    %v1072 = vsub.f32 %v1049, %v992
    %v1073 = vsub.f32 %v1051, %v993
    %v1074 = vsub.f32 %v1053, %v994
    %v1075 = vsub.f32 %v1055, %v995
    %v1076 = vsub.f32 %v1057, %v996
    %v1077 = vsub.f32 %v1059, %v997
    %v1078 = vsub.f32 %v1061, %v998
    %v1079 = vsub.f32 %v1063, %v999
    %vm1080 = vcmp.lt.s32.totalorder %v314, 16
    %vm1081 = vcmp.lt.s32.totalorder %v315, 16
    %vm1082 = vcmp.lt.s32.totalorder %v316, 16
    %vm1083 = vcmp.lt.s32.totalorder %v317, 16
    %vm1084 = vcmp.lt.s32.totalorder %v318, 16
    %vm1085 = vcmp.lt.s32.totalorder %v319, 16
    %vm1086 = vcmp.lt.s32.totalorder %v320, 16
    %vm1087 = vcmp.lt.s32.totalorder %v321, 16
    %vm1088 = vcmp.lt.s32.totalorder %v322, 16
    %vm1089 = vcmp.lt.s32.totalorder %v323, 16
    %vm1090 = vcmp.lt.s32.totalorder %v324, 16
    %vm1091 = vcmp.lt.s32.totalorder %v325, 16
    %vm1092 = vcmp.lt.s32.totalorder %v326, 16
    %vm1093 = vcmp.lt.s32.totalorder %v327, 16
    %vm1094 = vcmp.lt.s32.totalorder %v328, 16
    %vm1095 = vcmp.lt.s32.totalorder %v329, 16
    %v1096 = vmul.f32 %v1064, -1.0
    %v1097 = vmul.f32 %v1065, -1.0
    %v1098 = vmul.f32 %v1066, -1.0
    %v1099 = vmul.f32 %v1067, -1.0
    %v1100 = vmul.f32 %v1068, -1.0
    %v1101 = vmul.f32 %v1069, -1.0
    %v1102 = vmul.f32 %v1070, -1.0
    %v1103 = vmul.f32 %v1071, -1.0
    %v1104 = vmul.f32 %v1072, -1.0
    %v1105 = vmul.f32 %v1073, -1.0
    %v1106 = vmul.f32 %v1074, -1.0
    %v1107 = vmul.f32 %v1075, -1.0
    %v1108 = vmul.f32 %v1076, -1.0
    %v1109 = vmul.f32 %v1077, -1.0
    %v1110 = vmul.f32 %v1078, -1.0
    %v1111 = vmul.f32 %v1079, -1.0
    %v1112 = vsel %vm1080, %v1096, 0.0
    %v1113 = vsel %vm1081, %v1097, 0.0
    %v1114 = vsel %vm1082, %v1098, 0.0
    %v1115 = vsel %vm1083, %v1099, 0.0
    %v1116 = vsel %vm1084, %v1100, 0.0
    %v1117 = vsel %vm1085, %v1101, 0.0
    %v1118 = vsel %vm1086, %v1102, 0.0
    %v1119 = vsel %vm1087, %v1103, 0.0
    %v1120 = vsel %vm1088, %v1104, 0.0
    %v1121 = vsel %vm1089, %v1105, 0.0
    %v1122 = vsel %vm1090, %v1106, 0.0
    %v1123 = vsel %vm1091, %v1107, 0.0
    %v1124 = vsel %vm1092, %v1108, 0.0
    %v1125 = vsel %vm1093, %v1109, 0.0
    %v1126 = vsel %vm1094, %v1110, 0.0
    %v1127 = vsel %vm1095, %v1111, 0.0
    %1128 = vst.msk [vmem:[%s6] sm:$0xff] %vm687, %v1112
    %1129 = vst.msk [vmem:[%s6 + $0x8] sm:$0xff] %vm687, %v1113
    %1130 = vst.msk [vmem:[%s6 + $0x10] sm:$0xff] %vm687, %v1114
    %1131 = vst.msk [vmem:[%s6 + $0x18] sm:$0xff] %vm687, %v1115
    %1132 = vst.msk [vmem:[%s6 + $0x20] sm:$0xff] %vm687, %v1116
    %1133 = vst.msk [vmem:[%s6 + $0x28] sm:$0xff] %vm687, %v1117
    %1134 = vst.msk [vmem:[%s6 + $0x30] sm:$0xff] %vm687, %v1118
    %1135 = vst.msk [vmem:[%s6 + $0x38] sm:$0xff] %vm687, %v1119
    %1136 = vst.msk [vmem:[%s6 + $0x40] sm:$0xff] %vm687, %v1120
    %1137 = vst.msk [vmem:[%s6 + $0x48] sm:$0xff] %vm687, %v1121
    %1138 = vst.msk [vmem:[%s6 + $0x50] sm:$0xff] %vm687, %v1122
    %1139 = vst.msk [vmem:[%s6 + $0x58] sm:$0xff] %vm687, %v1123
    %1140 = vst.msk [vmem:[%s6 + $0x60] sm:$0xff] %vm687, %v1124
    %1141 = vst.msk [vmem:[%s6 + $0x68] sm:$0xff] %vm687, %v1125
    %1142 = vst.msk [vmem:[%s6 + $0x70] sm:$0xff] %vm687, %v1126
    %1143 = vst.msk [vmem:[%s6 + $0x78] sm:$0xff] %vm687, %v1127
  $region33: #{tpu_custom_call.1} parent=0 // pred_fallthru
    _
  // Predicated region
  $region34: #{tpu_custom_call.1} parent=0 // pred_check
    _
  $region35: #{tpu_custom_call.1} parent=0 // pred_check_branch
    %1145 = sbr.rel (0) target = $region37
  $region36: #{tpu_custom_call.1} parent=0 // pred_region
    _
  $region37: #{tpu_custom_call.1} parent=0 // pred_fallthru
    _
  // Predicated region
  $region38: #{tpu_custom_call.1} parent=0 // pred_check
    _
  $region39: #{tpu_custom_call.1} parent=0 // pred_check_branch
    %1147 = sbr.rel (0) target = $region41
  $region40: #{tpu_custom_call.1} parent=0 // pred_region
    _
  $region41: #{tpu_custom_call.1} parent=0 // pred_fallthru
    _

// kernel: tpu_custom_call.1
$region0: #{tpu_custom_call.1}
  #allocation0 [shape = 'u32[]', space=smem, size = 0x4, offset = 0x4, fixed_abs, tag = 'smem constant byte address 0x4 - core index']
  #allocation1 [shape = 'u32[144,128]{1,0:T(1,128)}', space=vmem, size = 0x12000, scoped, tag = 'internal scratch']
  #allocation2 [shape = 'f32[128,1]{1,0:T(8,128)}', space=vmem, size = 0x10000, scoped, tag = 'scratch operand']
  #allocation3 [shape = 'f32[128,1]{1,0:T(8,128)}', space=vmem, size = 0x10000, scoped, tag = 'scratch operand']
  #allocation4 [shape = 'f32[128,1]{1,0:T(8,128)}', space=vmem, size = 0x10000, scoped, tag = 'scratch operand']
  %s0 = inlined_call_operand.vmem [shape: f32[128,128], index: 0, kind: input, shape index: {}]
  %s1 = inlined_call_operand.vmem [shape: s32[128,1], index: 1, kind: input, shape index: {}]
  %s2 = inlined_call_operand.vmem [shape: s32[1,128], index: 2, kind: input, shape index: {}]
  %s3 = inlined_call_operand.vmem [shape: f32[1,128], index: 3, kind: input, shape index: {}]
  %s4 = inlined_call_operand.vmem [shape: s32[1,128], index: 4, kind: input, shape index: {}]
  %s5 = inlined_call_operand.vmem [shape: f32[128,1], index: 5, kind: input, shape index: {}]
  %s6 = inlined_call_operand.vmem [shape: f32[128,1], index: 6, kind: output, shape index: {}]
  %s7 = sld [smem:[#allocation0]]
  $region42: #{tpu_custom_call.1} parent=0
    _
  %s9 = ssub.s32 1, %s7
  %s10 = scalar_select 0, %s9, %s7
  // Predicated region
  $region2: #{tpu_custom_call.1} parent=0 // pred_check
    _
  $region3: #{tpu_custom_call.1} parent=0 // pred_check_branch
    %12 = sbr.rel (0) target = $region5
  $region4: #{tpu_custom_call.1} parent=0 // pred_region
    _
  $region5: #{tpu_custom_call.1} parent=0 // pred_fallthru
    _
  // Predicated region
  $region6: #{tpu_custom_call.1} parent=0 // pred_check
    _
  $region7: #{tpu_custom_call.1} parent=0 // pred_check_branch
    %14 = sbr.rel (0) target = $region9
  $region8: #{tpu_custom_call.1} parent=0 // pred_region
    _
  $region9: #{tpu_custom_call.1} parent=0 // pred_fallthru
    _
  // Predicated region
  $region10: #{tpu_custom_call.1} parent=0 // pred_check
    _
  $region11: #{tpu_custom_call.1} parent=0 // pred_check_branch
    %16 = sbr.rel (0) target = $region13
  $region12: #{tpu_custom_call.1} parent=0 // pred_region
    _
  $region13: #{tpu_custom_call.1} parent=0 // pred_fallthru
    _
  // Predicated region
  $region14: #{tpu_custom_call.1} parent=0 // pred_check
    _
  $region15: #{tpu_custom_call.1} parent=0 // pred_check_branch
    %18 = sbr.rel (0) target = $region17
  $region16: #{tpu_custom_call.1} parent=0 // pred_region
    _
  $region17: #{tpu_custom_call.1} parent=0 // pred_fallthru
    _
  // Predicated region
  $region18: #{tpu_custom_call.1} parent=0 // pred_check
    _
  $region19: #{tpu_custom_call.1} parent=0 // pred_check_branch
    %20 = sbr.rel (0) target = $region21
  $region20: #{tpu_custom_call.1} parent=0 // pred_region
    _
  $region21: #{tpu_custom_call.1} parent=0 // pred_fallthru
    _
  // Predicated region
  $region22: #{tpu_custom_call.1} parent=0 // pred_check
    _
  $region23: #{tpu_custom_call.1} parent=0 // pred_check_branch
    %22 = sbr.rel (0) target = $region25
  $region24: #{tpu_custom_call.1} parent=0 // pred_region
    _
  $region25: #{tpu_custom_call.1} parent=0 // pred_fallthru
    _
  %p23 = scmp.eq.s32.totalorder 0, 0
  // Predicated region
  $region26: #{tpu_custom_call.1} parent=0 // pred_check
    %p24 = pneg %p23
  $region27: #{tpu_custom_call.1} parent=0 // pred_check_branch
    %26 = sbr.rel (%p24) target = $region29
  $region28: #{tpu_custom_call.1} parent=0 // pred_region
    %vm27 = vcmask 7168
    %28 = vst.msk [vmem:[#allocation2] sm:$0xff] %vm27, -inf
    %29 = vst.msk [vmem:[#allocation2 + $0x8] sm:$0xff] %vm27, -inf
    %30 = vst.msk [vmem:[#allocation2 + $0x10] sm:$0xff] %vm27, -inf
    %31 = vst.msk [vmem:[#allocation2 + $0x18] sm:$0xff] %vm27, -inf
    %32 = vst.msk [vmem:[#allocation2 + $0x20] sm:$0xff] %vm27, -inf
    %33 = vst.msk [vmem:[#allocation2 + $0x28] sm:$0xff] %vm27, -inf
    %34 = vst.msk [vmem:[#allocation2 + $0x30] sm:$0xff] %vm27, -inf
    %35 = vst.msk [vmem:[#allocation2 + $0x38] sm:$0xff] %vm27, -inf
    %36 = vst.msk [vmem:[#allocation2 + $0x40] sm:$0xff] %vm27, -inf
    %37 = vst.msk [vmem:[#allocation2 + $0x48] sm:$0xff] %vm27, -inf
    %38 = vst.msk [vmem:[#allocation2 + $0x50] sm:$0xff] %vm27, -inf
    %39 = vst.msk [vmem:[#allocation2 + $0x58] sm:$0xff] %vm27, -inf
    %40 = vst.msk [vmem:[#allocation2 + $0x60] sm:$0xff] %vm27, -inf
    %41 = vst.msk [vmem:[#allocation2 + $0x68] sm:$0xff] %vm27, -inf
    %42 = vst.msk [vmem:[#allocation2 + $0x70] sm:$0xff] %vm27, -inf
    %43 = vst.msk [vmem:[#allocation2 + $0x78] sm:$0xff] %vm27, -inf
    %44 = vst.msk [vmem:[#allocation3] sm:$0xff] %vm27, 0.0
    %45 = vst.msk [vmem:[#allocation3 + $0x8] sm:$0xff] %vm27, 0.0
    %46 = vst.msk [vmem:[#allocation3 + $0x10] sm:$0xff] %vm27, 0.0
    %47 = vst.msk [vmem:[#allocation3 + $0x18] sm:$0xff] %vm27, 0.0
    %48 = vst.msk [vmem:[#allocation3 + $0x20] sm:$0xff] %vm27, 0.0
    %49 = vst.msk [vmem:[#allocation3 + $0x28] sm:$0xff] %vm27, 0.0
    %50 = vst.msk [vmem:[#allocation3 + $0x30] sm:$0xff] %vm27, 0.0
    %51 = vst.msk [vmem:[#allocation3 + $0x38] sm:$0xff] %vm27, 0.0
    %52 = vst.msk [vmem:[#allocation3 + $0x40] sm:$0xff] %vm27, 0.0
    %53 = vst.msk [vmem:[#allocation3 + $0x48] sm:$0xff] %vm27, 0.0
    %54 = vst.msk [vmem:[#allocation3 + $0x50] sm:$0xff] %vm27, 0.0
    %55 = vst.msk [vmem:[#allocation3 + $0x58] sm:$0xff] %vm27, 0.0
    %56 = vst.msk [vmem:[#allocation3 + $0x60] sm:$0xff] %vm27, 0.0
    %57 = vst.msk [vmem:[#allocation3 + $0x68] sm:$0xff] %vm27, 0.0
    %58 = vst.msk [vmem:[#allocation3 + $0x70] sm:$0xff] %vm27, 0.0
    %59 = vst.msk [vmem:[#allocation3 + $0x78] sm:$0xff] %vm27, 0.0
    %60 = vst.msk [vmem:[#allocation4] sm:$0xff] %vm27, 0.0
    %61 = vst.msk [vmem:[#allocation4 + $0x8] sm:$0xff] %vm27, 0.0
    %62 = vst.msk [vmem:[#allocation4 + $0x10] sm:$0xff] %vm27, 0.0
    %63 = vst.msk [vmem:[#allocation4 + $0x18] sm:$0xff] %vm27, 0.0
    %64 = vst.msk [vmem:[#allocation4 + $0x20] sm:$0xff] %vm27, 0.0
    %65 = vst.msk [vmem:[#allocation4 + $0x28] sm:$0xff] %vm27, 0.0
    %66 = vst.msk [vmem:[#allocation4 + $0x30] sm:$0xff] %vm27, 0.0
    %67 = vst.msk [vmem:[#allocation4 + $0x38] sm:$0xff] %vm27, 0.0
    %68 = vst.msk [vmem:[#allocation4 + $0x40] sm:$0xff] %vm27, 0.0
    %69 = vst.msk [vmem:[#allocation4 + $0x48] sm:$0xff] %vm27, 0.0
    %70 = vst.msk [vmem:[#allocation4 + $0x50] sm:$0xff] %vm27, 0.0
    %71 = vst.msk [vmem:[#allocation4 + $0x58] sm:$0xff] %vm27, 0.0
    %72 = vst.msk [vmem:[#allocation4 + $0x60] sm:$0xff] %vm27, 0.0
    %73 = vst.msk [vmem:[#allocation4 + $0x68] sm:$0xff] %vm27, 0.0
    %74 = vst.msk [vmem:[#allocation4 + $0x70] sm:$0xff] %vm27, 0.0
    %75 = vst.msk [vmem:[#allocation4 + $0x78] sm:$0xff] %vm27, 0.0
  $region29: #{tpu_custom_call.1} parent=0 // pred_fallthru
    _
  %s76 = smul.u32 0, 128
  %s77 = smul.u32 0, 128
  %s78 = scalar_lea.vmem %s0, %s76
  %v79 = vld [vmem:[%s78] sm:$0xff]
  %v80 = vld [vmem:[%s78 + $0x8] sm:$0xff]
  %v81 = vld [vmem:[%s78 + $0x10] sm:$0xff]
  %v82 = vld [vmem:[%s78 + $0x18] sm:$0xff]
  %v83 = vld [vmem:[%s78 + $0x20] sm:$0xff]
  %v84 = vld [vmem:[%s78 + $0x28] sm:$0xff]
  %v85 = vld [vmem:[%s78 + $0x30] sm:$0xff]
  %v86 = vld [vmem:[%s78 + $0x38] sm:$0xff]
  %v87 = vld [vmem:[%s78 + $0x40] sm:$0xff]
  %v88 = vld [vmem:[%s78 + $0x48] sm:$0xff]
  %v89 = vld [vmem:[%s78 + $0x50] sm:$0xff]
  %v90 = vld [vmem:[%s78 + $0x58] sm:$0xff]
  %v91 = vld [vmem:[%s78 + $0x60] sm:$0xff]
  %v92 = vld [vmem:[%s78 + $0x68] sm:$0xff]
  %v93 = vld [vmem:[%s78 + $0x70] sm:$0xff]
  %v94 = vld [vmem:[%s78 + $0x78] sm:$0xff]
  %s95 = scalar_lea.vmem %s0, %s77
  %v96 = vld [vmem:[%s95] sm:$0xff]
  %v97 = vld [vmem:[%s95 + $0x8] sm:$0xff]
  %v98 = vld [vmem:[%s95 + $0x10] sm:$0xff]
  %v99 = vld [vmem:[%s95 + $0x18] sm:$0xff]
  %v100 = vld [vmem:[%s95 + $0x20] sm:$0xff]
  %v101 = vld [vmem:[%s95 + $0x28] sm:$0xff]
  %v102 = vld [vmem:[%s95 + $0x30] sm:$0xff]
  %v103 = vld [vmem:[%s95 + $0x38] sm:$0xff]
  %v104 = vld [vmem:[%s95 + $0x40] sm:$0xff]
  %v105 = vld [vmem:[%s95 + $0x48] sm:$0xff]
  %v106 = vld [vmem:[%s95 + $0x50] sm:$0xff]
  %v107 = vld [vmem:[%s95 + $0x58] sm:$0xff]
  %v108 = vld [vmem:[%s95 + $0x60] sm:$0xff]
  %v109 = vld [vmem:[%s95 + $0x68] sm:$0xff]
  %v110 = vld [vmem:[%s95 + $0x70] sm:$0xff]
  %v111 = vld [vmem:[%s95 + $0x78] sm:$0xff]
  %112 = vmatprep.subr.mxu0 0.0
  %113 = vmatpush1.xpose.msra.mxu0 %v96
  %114 = vmatprep.subr.mxu0 0.0
  %115 = vmatpush1.xpose.msra.mxu0 %v97
  %116 = vmatprep.subr.mxu0 0.0
  %117 = vmatpush1.xpose.msra.mxu0 %v98
  %118 = vmatprep.subr.mxu0 0.0
  %119 = vmatpush1.xpose.msra.mxu0 %v99
  %120 = vmatprep.subr.mxu0 0.0
  %121 = vmatpush1.xpose.msra.mxu0 %v100
  %122 = vmatprep.subr.mxu0 0.0
  %123 = vmatpush1.xpose.msra.mxu0 %v101
  %124 = vmatprep.subr.mxu0 0.0
  %125 = vmatpush1.xpose.msra.mxu0 %v102
  %126 = vmatprep.subr.mxu0 0.0
  %127 = vmatpush1.xpose.msra.mxu0 %v103
  %128 = vmatprep.subr.mxu0 0.0
  %129 = vmatpush1.xpose.msra.mxu0 %v104
  %130 = vmatprep.subr.mxu0 0.0
  %131 = vmatpush1.xpose.msra.mxu0 %v105
  %132 = vmatprep.subr.mxu0 0.0
  %133 = vmatpush1.xpose.msra.mxu0 %v106
  %134 = vmatprep.subr.mxu0 0.0
  %135 = vmatpush1.xpose.msra.mxu0 %v107
  %136 = vmatprep.subr.mxu0 0.0
  %137 = vmatpush1.xpose.msra.mxu0 %v108
  %138 = vmatprep.subr.mxu0 0.0
  %139 = vmatpush1.xpose.msra.mxu0 %v109
  %140 = vmatprep.subr.mxu0 0.0
  %141 = vmatpush1.xpose.msra.mxu0 %v110
  %142 = vmatprep.subr.mxu0 0.0
  %143 = vmatpush1.xpose.msra.mxu0 %v111
  %144 = vmatprep.subr.mxu0 0.0
  %145 = vmatpush1.xpose.msra.mxu0 0.0
  %146 = vmatprep.subr.mxu0 0.0
  %147 = vmatpush1.xpose.msra.mxu0 0.0
  %148 = vmatprep.subr.mxu0 0.0
  %149 = vmatpush1.xpose.msra.mxu0 0.0
  %150 = vmatprep.subr.mxu0 0.0
  %151 = vmatpush1.xpose.msra.mxu0 0.0
  %152 = vmatprep.subr.mxu0 0.0
  %153 = vmatpush1.xpose.msra.mxu0 0.0
  %154 = vmatprep.subr.mxu0 0.0
  %155 = vmatpush1.xpose.msra.mxu0 0.0
  %156 = vmatprep.subr.mxu0 0.0
  %157 = vmatpush1.xpose.msra.mxu0 0.0
  %158 = vmatprep.subr.mxu0 0.0
  %159 = vmatpush1.xpose.msra.mxu0 0.0
  %160 = vmatprep.subr.mxu0 0.0
  %161 = vmatpush1.xpose.msra.mxu0 0.0
  %162 = vmatprep.subr.mxu0 0.0
  %163 = vmatpush1.xpose.msra.mxu0 0.0
  %164 = vmatprep.subr.mxu0 0.0
  %165 = vmatpush1.xpose.msra.mxu0 0.0
  %166 = vmatprep.subr.mxu0 0.0
  %167 = vmatpush1.xpose.msra.mxu0 0.0
  %168 = vmatprep.subr.mxu0 0.0
  %169 = vmatpush1.xpose.msra.mxu0 0.0
  %170 = vmatprep.subr.mxu0 0.0
  %171 = vmatpush1.xpose.msra.mxu0 0.0
  %172 = vmatprep.subr.mxu0 0.0
  %173 = vmatpush1.xpose.msra.mxu0 0.0
  %174 = vmatprep.subr.mxu0 0.0
  %175 = vmatpush1.xpose.msra.mxu0 0.0
  %176 = vmatprep.mubr.f32.mxu0 0.0
  %177 = vmatmul.mubr.f32.gmra.mrb[0].mxu0 %v79
  %v178 = vpop.f32.mrb[0].mxu0
  %v179 = vadd.f32 0.0, %v178
  %v180 = vpop.f32.mrb[0].mxu0
  %181 = vmatprep.mubr.f32.mxu0 0.0
  %182 = vmatmul.mubr.f32.gmra.mrb[0].mxu0 %v80
  %v183 = vpop.f32.mrb[0].mxu0
  %v184 = vadd.f32 0.0, %v183
  %v185 = vpop.f32.mrb[0].mxu0
  %186 = vmatprep.mubr.f32.mxu0 0.0
  %187 = vmatmul.mubr.f32.gmra.mrb[0].mxu0 %v81
  %v188 = vpop.f32.mrb[0].mxu0
  %v189 = vadd.f32 0.0, %v188
  %v190 = vpop.f32.mrb[0].mxu0
  %191 = vmatprep.mubr.f32.mxu0 0.0
  %192 = vmatmul.mubr.f32.gmra.mrb[0].mxu0 %v82
  %v193 = vpop.f32.mrb[0].mxu0
  %v194 = vadd.f32 0.0, %v193
  %v195 = vpop.f32.mrb[0].mxu0
  %196 = vmatprep.mubr.f32.mxu0 0.0
  %197 = vmatmul.mubr.f32.gmra.mrb[0].mxu0 %v83
  %v198 = vpop.f32.mrb[0].mxu0
  %v199 = vadd.f32 0.0, %v198
  %v200 = vpop.f32.mrb[0].mxu0
  %201 = vmatprep.mubr.f32.mxu0 0.0
  %202 = vmatmul.mubr.f32.gmra.mrb[0].mxu0 %v84
  %v203 = vpop.f32.mrb[0].mxu0
  %v204 = vadd.f32 0.0, %v203
  %v205 = vpop.f32.mrb[0].mxu0
  %206 = vmatprep.mubr.f32.mxu0 0.0
  %207 = vmatmul.mubr.f32.gmra.mrb[0].mxu0 %v85
  %v208 = vpop.f32.mrb[0].mxu0
  %v209 = vadd.f32 0.0, %v208
  %v210 = vpop.f32.mrb[0].mxu0
  %211 = vmatprep.mubr.f32.mxu0 0.0
  %212 = vmatmul.mubr.f32.gmra.mrb[0].mxu0 %v86
  %v213 = vpop.f32.mrb[0].mxu0
  %v214 = vadd.f32 0.0, %v213
  %v215 = vpop.f32.mrb[0].mxu0
  %216 = vmatprep.mubr.f32.mxu0 0.0
  %217 = vmatmul.mubr.f32.gmra.mrb[0].mxu0 %v87
  %v218 = vpop.f32.mrb[0].mxu0
  %v219 = vadd.f32 0.0, %v218
  %v220 = vpop.f32.mrb[0].mxu0
  %221 = vmatprep.mubr.f32.mxu0 0.0
  %222 = vmatmul.mubr.f32.gmra.mrb[0].mxu0 %v88
  %v223 = vpop.f32.mrb[0].mxu0
  %v224 = vadd.f32 0.0, %v223
  %v225 = vpop.f32.mrb[0].mxu0
  %226 = vmatprep.mubr.f32.mxu0 0.0
  %227 = vmatmul.mubr.f32.gmra.mrb[0].mxu0 %v89
  %v228 = vpop.f32.mrb[0].mxu0
  %v229 = vadd.f32 0.0, %v228
  %v230 = vpop.f32.mrb[0].mxu0
  %231 = vmatprep.mubr.f32.mxu0 0.0
  %232 = vmatmul.mubr.f32.gmra.mrb[0].mxu0 %v90
  %v233 = vpop.f32.mrb[0].mxu0
  %v234 = vadd.f32 0.0, %v233
  %v235 = vpop.f32.mrb[0].mxu0
  %236 = vmatprep.mubr.f32.mxu0 0.0
  %237 = vmatmul.mubr.f32.gmra.mrb[0].mxu0 %v91
  %v238 = vpop.f32.mrb[0].mxu0
  %v239 = vadd.f32 0.0, %v238
  %v240 = vpop.f32.mrb[0].mxu0
  %241 = vmatprep.mubr.f32.mxu0 0.0
  %242 = vmatmul.mubr.f32.gmra.mrb[0].mxu0 %v92
  %v243 = vpop.f32.mrb[0].mxu0
  %v244 = vadd.f32 0.0, %v243
  %v245 = vpop.f32.mrb[0].mxu0
  %246 = vmatprep.mubr.f32.mxu0 0.0
  %247 = vmatmul.mubr.f32.gmra.mrb[0].mxu0 %v93
  %v248 = vpop.f32.mrb[0].mxu0
  %v249 = vadd.f32 0.0, %v248
  %v250 = vpop.f32.mrb[0].mxu0
  %251 = vmatprep.mubr.f32.mxu0 0.0
  %252 = vmatmul.mubr.f32.gmra.mrb[0].mxu0 %v94
  %v253 = vpop.f32.mrb[0].mxu0
  %v254 = vadd.f32 0.0, %v253
  %v255 = vpop.f32.mrb[0].mxu0
  %256 = vdwg.mxu0
  %v257 = vmul.f32 %v179, 14.285714
  %v258 = vmul.f32 %v184, 14.285714
  %v259 = vmul.f32 %v189, 14.285714
  %v260 = vmul.f32 %v194, 14.285714
  %v261 = vmul.f32 %v199, 14.285714
  %v262 = vmul.f32 %v204, 14.285714
  %v263 = vmul.f32 %v209, 14.285714
  %v264 = vmul.f32 %v214, 14.285714
  %v265 = vmul.f32 %v219, 14.285714
  %v266 = vmul.f32 %v224, 14.285714
  %v267 = vmul.f32 %v229, 14.285714
  %v268 = vmul.f32 %v234, 14.285714
  %v269 = vmul.f32 %v239, 14.285714
  %v270 = vmul.f32 %v244, 14.285714
  %v271 = vmul.f32 %v249, 14.285714
  %v272 = vmul.f32 %v254, 14.285714
  %v273 = vld [vmem:[%s3] sm:$0x1]
  %v275 = vlaneseq
  %v276 = vshrl.u32 %v275, 7
  %v277 = vsub.s32 0, %v276
  %v278 = vrot.slane %v273, %v277
  %v280 = vadd.f32 %v257, %v278
  %v281 = vadd.f32 %v258, %v278
  %v282 = vadd.f32 %v259, %v278
  %v283 = vadd.f32 %v260, %v278
  %v284 = vadd.f32 %v261, %v278
  %v285 = vadd.f32 %v262, %v278
  %v286 = vadd.f32 %v263, %v278
  %v287 = vadd.f32 %v264, %v278
  %v288 = vadd.f32 %v265, %v278
  %v289 = vadd.f32 %v266, %v278
  %v290 = vadd.f32 %v267, %v278
  %v291 = vadd.f32 %v268, %v278
  %v292 = vadd.f32 %v269, %v278
  %v293 = vadd.f32 %v270, %v278
  %v294 = vadd.f32 %v271, %v278
  %v295 = vadd.f32 %v272, %v278
  %v296 = vlaneseq
  %v297 = vshrl.u32 %v296, 7
  %v298 = vadd.s32 %v297, 8
  %v299 = vadd.s32 %v297, 16
  %v300 = vadd.s32 %v297, 24
  %v301 = vadd.s32 %v297, 32
  %v302 = vadd.s32 %v297, 40
  %v303 = vadd.s32 %v297, 48
  %v304 = vadd.s32 %v297, 56
  %v305 = vadd.s32 %v297, 64
  %v306 = vadd.s32 %v297, 72
  %v307 = vadd.s32 %v297, 80
  %v308 = vadd.s32 %v297, 88
  %v309 = vadd.s32 %v297, 96
  %v310 = vadd.s32 %v297, 104
  %v311 = vadd.s32 %v297, 112
  %v312 = vadd.s32 %v297, 120
  %v313 = vstv %s76
  %v314 = vadd.s32 %v313, %v297
  %v315 = vadd.s32 %v313, %v298
  %v316 = vadd.s32 %v313, %v299
  %v317 = vadd.s32 %v313, %v300
  %v318 = vadd.s32 %v313, %v301
  %v319 = vadd.s32 %v313, %v302
  %v320 = vadd.s32 %v313, %v303
  %v321 = vadd.s32 %v313, %v304
  %v322 = vadd.s32 %v313, %v305
  %v323 = vadd.s32 %v313, %v306
  %v324 = vadd.s32 %v313, %v307
  %v325 = vadd.s32 %v313, %v308
  %v326 = vadd.s32 %v313, %v309
  %v327 = vadd.s32 %v313, %v310
  %v328 = vadd.s32 %v313, %v311
  %v329 = vadd.s32 %v313, %v312
  %v330 = vld [vmem:[%s4] sm:$0x1]
  %v331 = vlaneseq
  %v332 = vshrl.u32 %v331, 7
  %v333 = vsub.s32 0, %v332
  %v334 = vrot.slane %v330, %v333
  %vm335 = vcmp.eq.s32.totalorder %v334, %v314
  %vm336 = vcmp.eq.s32.totalorder %v334, %v315
  %vm337 = vcmp.eq.s32.totalorder %v334, %v316
  %vm338 = vcmp.eq.s32.totalorder %v334, %v317
  %vm339 = vcmp.eq.s32.totalorder %v334, %v318
  %vm340 = vcmp.eq.s32.totalorder %v334, %v319
  %vm341 = vcmp.eq.s32.totalorder %v334, %v320
  %vm342 = vcmp.eq.s32.totalorder %v334, %v321
  %vm343 = vcmp.eq.s32.totalorder %v334, %v322
  %vm344 = vcmp.eq.s32.totalorder %v334, %v323
  %vm345 = vcmp.eq.s32.totalorder %v334, %v324
  %vm346 = vcmp.eq.s32.totalorder %v334, %v325
  %vm347 = vcmp.eq.s32.totalorder %v334, %v326
  %vm348 = vcmp.eq.s32.totalorder %v334, %v327
  %vm349 = vcmp.eq.s32.totalorder %v334, %v328
  %vm350 = vcmp.eq.s32.totalorder %v334, %v329
  %v351 = vld [vmem:[#allocation2] sm:$0xff]
  %v352 = vld [vmem:[#allocation2 + $0x8] sm:$0xff]
  %v353 = vld [vmem:[#allocation2 + $0x10] sm:$0xff]
  %v354 = vld [vmem:[#allocation2 + $0x18] sm:$0xff]
  %v355 = vld [vmem:[#allocation2 + $0x20] sm:$0xff]
  %v356 = vld [vmem:[#allocation2 + $0x28] sm:$0xff]
  %v357 = vld [vmem:[#allocation2 + $0x30] sm:$0xff]
  %v358 = vld [vmem:[#allocation2 + $0x38] sm:$0xff]
  %v359 = vld [vmem:[#allocation2 + $0x40] sm:$0xff]
  %v360 = vld [vmem:[#allocation2 + $0x48] sm:$0xff]
  %v361 = vld [vmem:[#allocation2 + $0x50] sm:$0xff]
  %v362 = vld [vmem:[#allocation2 + $0x58] sm:$0xff]
  %v363 = vld [vmem:[#allocation2 + $0x60] sm:$0xff]
  %v364 = vld [vmem:[#allocation2 + $0x68] sm:$0xff]
  %v365 = vld [vmem:[#allocation2 + $0x70] sm:$0xff]
  %v366 = vld [vmem:[#allocation2 + $0x78] sm:$0xff]
  %367 = vmax.xlane.f32.xlu0 %v280
  %v368 = vpop.xlane.xlu0 %367
  %369 = vmax.xlane.f32.xlu0 %v281
  %v370 = vpop.xlane.xlu0 %369
  %371 = vmax.xlane.f32.xlu0 %v282
  %v372 = vpop.xlane.xlu0 %371
  %373 = vmax.xlane.f32.xlu0 %v283
  %v374 = vpop.xlane.xlu0 %373
  %375 = vmax.xlane.f32.xlu0 %v284
  %v376 = vpop.xlane.xlu0 %375
  %377 = vmax.xlane.f32.xlu0 %v285
  %v378 = vpop.xlane.xlu0 %377
  %379 = vmax.xlane.f32.xlu0 %v286
  %v380 = vpop.xlane.xlu0 %379
  %381 = vmax.xlane.f32.xlu0 %v287
  %v382 = vpop.xlane.xlu0 %381
  %383 = vmax.xlane.f32.xlu0 %v288
  %v384 = vpop.xlane.xlu0 %383
  %385 = vmax.xlane.f32.xlu0 %v289
  %v386 = vpop.xlane.xlu0 %385
  %387 = vmax.xlane.f32.xlu0 %v290
  %v388 = vpop.xlane.xlu0 %387
  %389 = vmax.xlane.f32.xlu0 %v291
  %v390 = vpop.xlane.xlu0 %389
  %391 = vmax.xlane.f32.xlu0 %v292
  %v392 = vpop.xlane.xlu0 %391
  %393 = vmax.xlane.f32.xlu0 %v293
  %v394 = vpop.xlane.xlu0 %393
  %395 = vmax.xlane.f32.xlu0 %v294
  %v396 = vpop.xlane.xlu0 %395
  %397 = vmax.xlane.f32.xlu0 %v295
  %v398 = vpop.xlane.xlu0 %397
  %v399 = vmax.f32 %v351, %v368
  %v400 = vmax.f32 %v352, %v370
  %v401 = vmax.f32 %v353, %v372
  %v402 = vmax.f32 %v354, %v374
  %v403 = vmax.f32 %v355, %v376
  %v404 = vmax.f32 %v356, %v378
  %v405 = vmax.f32 %v357, %v380
  %v406 = vmax.f32 %v358, %v382
  %v407 = vmax.f32 %v359, %v384
  %v408 = vmax.f32 %v360, %v386
  %v409 = vmax.f32 %v361, %v388
  %v410 = vmax.f32 %v362, %v390
  %v411 = vmax.f32 %v363, %v392
  %v412 = vmax.f32 %v364, %v394
  %v413 = vmax.f32 %v365, %v396
  %v414 = vmax.f32 %v366, %v398
  %416 = vset.pattern.permute.xlu0 0
  %417 = vperm.xlu0 %416, %v399
  %v418 = vpop.permute.xlu0 %417
  %421 = vset.pattern.permute.xlu0 0
  %422 = vperm.xlu0 %421, %v400
  %v423 = vpop.permute.xlu0 %422
  %426 = vset.pattern.permute.xlu0 0
  %427 = vperm.xlu0 %426, %v401
  %v428 = vpop.permute.xlu0 %427
  %431 = vset.pattern.permute.xlu0 0
  %432 = vperm.xlu0 %431, %v402
  %v433 = vpop.permute.xlu0 %432
  %436 = vset.pattern.permute.xlu0 0
  %437 = vperm.xlu0 %436, %v403
  %v438 = vpop.permute.xlu0 %437
  %441 = vset.pattern.permute.xlu0 0
  %442 = vperm.xlu0 %441, %v404
  %v443 = vpop.permute.xlu0 %442
  %446 = vset.pattern.permute.xlu0 0
  %447 = vperm.xlu0 %446, %v405
  %v448 = vpop.permute.xlu0 %447
  %451 = vset.pattern.permute.xlu0 0
  %452 = vperm.xlu0 %451, %v406
  %v453 = vpop.permute.xlu0 %452
  %456 = vset.pattern.permute.xlu0 0
  %457 = vperm.xlu0 %456, %v407
  %v458 = vpop.permute.xlu0 %457
  %461 = vset.pattern.permute.xlu0 0
  %462 = vperm.xlu0 %461, %v408
  %v463 = vpop.permute.xlu0 %462
  %466 = vset.pattern.permute.xlu0 0
  %467 = vperm.xlu0 %466, %v409
  %v468 = vpop.permute.xlu0 %467
  %471 = vset.pattern.permute.xlu0 0
  %472 = vperm.xlu0 %471, %v410
  %v473 = vpop.permute.xlu0 %472
  %476 = vset.pattern.permute.xlu0 0
  %477 = vperm.xlu0 %476, %v411
  %v478 = vpop.permute.xlu0 %477
  %481 = vset.pattern.permute.xlu0 0
  %482 = vperm.xlu0 %481, %v412
  %v483 = vpop.permute.xlu0 %482
  %486 = vset.pattern.permute.xlu0 0
  %487 = vperm.xlu0 %486, %v413
  %v488 = vpop.permute.xlu0 %487
  %491 = vset.pattern.permute.xlu0 0
  %492 = vperm.xlu0 %491, %v414
  %v493 = vpop.permute.xlu0 %492
  %v495 = vsub.f32 %v280, %v418
  %v496 = vsub.f32 %v281, %v423
  %v497 = vsub.f32 %v282, %v428
  %v498 = vsub.f32 %v283, %v433
  %v499 = vsub.f32 %v284, %v438
  %v500 = vsub.f32 %v285, %v443
  %v501 = vsub.f32 %v286, %v448
  %v502 = vsub.f32 %v287, %v453
  %v503 = vsub.f32 %v288, %v458
  %v504 = vsub.f32 %v289, %v463
  %v505 = vsub.f32 %v290, %v468
  %v506 = vsub.f32 %v291, %v473
  %v507 = vsub.f32 %v292, %v478
  %v508 = vsub.f32 %v293, %v483
  %v509 = vsub.f32 %v294, %v488
  %v510 = vsub.f32 %v295, %v493
  %v511 = vmul.f32 %v495, 1.442695
  %v512 = vpow.pop %v511
  %v513 = vmul.f32 %v496, 1.442695
  %v514 = vpow.pop %v513
  %v515 = vmul.f32 %v497, 1.442695
  %v516 = vpow.pop %v515
  %v517 = vmul.f32 %v498, 1.442695
  %v518 = vpow.pop %v517
  %v519 = vmul.f32 %v499, 1.442695
  %v520 = vpow.pop %v519
  %v521 = vmul.f32 %v500, 1.442695
  %v522 = vpow.pop %v521
  %v523 = vmul.f32 %v501, 1.442695
  %v524 = vpow.pop %v523
  %v525 = vmul.f32 %v502, 1.442695
  %v526 = vpow.pop %v525
  %v527 = vmul.f32 %v503, 1.442695
  %v528 = vpow.pop %v527
  %v529 = vmul.f32 %v504, 1.442695
  %v530 = vpow.pop %v529
  %v531 = vmul.f32 %v505, 1.442695
  %v532 = vpow.pop %v531
  %v533 = vmul.f32 %v506, 1.442695
  %v534 = vpow.pop %v533
  %v535 = vmul.f32 %v507, 1.442695
  %v536 = vpow.pop %v535
  %v537 = vmul.f32 %v508, 1.442695
  %v538 = vpow.pop %v537
  %v539 = vmul.f32 %v509, 1.442695
  %v540 = vpow.pop %v539
  %v541 = vmul.f32 %v510, 1.442695
  %v542 = vpow.pop %v541
  %v543 = vsel %vm335, 0.0, %v512
  %v544 = vsel %vm336, 0.0, %v514
  %v545 = vsel %vm337, 0.0, %v516
  %v546 = vsel %vm338, 0.0, %v518
  %v547 = vsel %vm339, 0.0, %v520
  %v548 = vsel %vm340, 0.0, %v522
  %v549 = vsel %vm341, 0.0, %v524
  %v550 = vsel %vm342, 0.0, %v526
  %v551 = vsel %vm343, 0.0, %v528
  %v552 = vsel %vm344, 0.0, %v530
  %v553 = vsel %vm345, 0.0, %v532
  %v554 = vsel %vm346, 0.0, %v534
  %v555 = vsel %vm347, 0.0, %v536
  %v556 = vsel %vm348, 0.0, %v538
  %v557 = vsel %vm349, 0.0, %v540
  %v558 = vsel %vm350, 0.0, %v542
  %v559 = vld [vmem:[#allocation3] sm:$0xff]
  %v560 = vld [vmem:[#allocation3 + $0x8] sm:$0xff]
  %v561 = vld [vmem:[#allocation3 + $0x10] sm:$0xff]
  %v562 = vld [vmem:[#allocation3 + $0x18] sm:$0xff]
  %v563 = vld [vmem:[#allocation3 + $0x20] sm:$0xff]
  %v564 = vld [vmem:[#allocation3 + $0x28] sm:$0xff]
  %v565 = vld [vmem:[#allocation3 + $0x30] sm:$0xff]
  %v566 = vld [vmem:[#allocation3 + $0x38] sm:$0xff]
  %v567 = vld [vmem:[#allocation3 + $0x40] sm:$0xff]
  %v568 = vld [vmem:[#allocation3 + $0x48] sm:$0xff]
  %v569 = vld [vmem:[#allocation3 + $0x50] sm:$0xff]
  %v570 = vld [vmem:[#allocation3 + $0x58] sm:$0xff]
  %v571 = vld [vmem:[#allocation3 + $0x60] sm:$0xff]
  %v572 = vld [vmem:[#allocation3 + $0x68] sm:$0xff]
  %v573 = vld [vmem:[#allocation3 + $0x70] sm:$0xff]
  %v574 = vld [vmem:[#allocation3 + $0x78] sm:$0xff]
  %v575 = vsub.f32 %v351, %v399
  %v576 = vsub.f32 %v352, %v400
  %v577 = vsub.f32 %v353, %v401
  %v578 = vsub.f32 %v354, %v402
  %v579 = vsub.f32 %v355, %v403
  %v580 = vsub.f32 %v356, %v404
  %v581 = vsub.f32 %v357, %v405
  %v582 = vsub.f32 %v358, %v406
  %v583 = vsub.f32 %v359, %v407
  %v584 = vsub.f32 %v360, %v408
  %v585 = vsub.f32 %v361, %v409
  %v586 = vsub.f32 %v362, %v410
  %v587 = vsub.f32 %v363, %v411
  %v588 = vsub.f32 %v364, %v412
  %v589 = vsub.f32 %v365, %v413
  %v590 = vsub.f32 %v366, %v414
  %v591 = vmul.f32 %v575, 1.442695
  %v592 = vpow.pop %v591
  %v593 = vmul.f32 %v576, 1.442695
  %v594 = vpow.pop %v593
  %v595 = vmul.f32 %v577, 1.442695
  %v596 = vpow.pop %v595
  %v597 = vmul.f32 %v578, 1.442695
  %v598 = vpow.pop %v597
  %v599 = vmul.f32 %v579, 1.442695
  %v600 = vpow.pop %v599
  %v601 = vmul.f32 %v580, 1.442695
  %v602 = vpow.pop %v601
  %v603 = vmul.f32 %v581, 1.442695
  %v604 = vpow.pop %v603
  %v605 = vmul.f32 %v582, 1.442695
  %v606 = vpow.pop %v605
  %v607 = vmul.f32 %v583, 1.442695
  %v608 = vpow.pop %v607
  %v609 = vmul.f32 %v584, 1.442695
  %v610 = vpow.pop %v609
  %v611 = vmul.f32 %v585, 1.442695
  %v612 = vpow.pop %v611
  %v613 = vmul.f32 %v586, 1.442695
  %v614 = vpow.pop %v613
  %v615 = vmul.f32 %v587, 1.442695
  %v616 = vpow.pop %v615
  %v617 = vmul.f32 %v588, 1.442695
  %v618 = vpow.pop %v617
  %v619 = vmul.f32 %v589, 1.442695
  %v620 = vpow.pop %v619
  %v621 = vmul.f32 %v590, 1.442695
  %v622 = vpow.pop %v621
  %v623 = vmul.f32 %v559, %v592
  %v624 = vmul.f32 %v560, %v594
  %v625 = vmul.f32 %v561, %v596
  %v626 = vmul.f32 %v562, %v598
  %v627 = vmul.f32 %v563, %v600
  %v628 = vmul.f32 %v564, %v602
  %v629 = vmul.f32 %v565, %v604
  %v630 = vmul.f32 %v566, %v606
  %v631 = vmul.f32 %v567, %v608
  %v632 = vmul.f32 %v568, %v610
  %v633 = vmul.f32 %v569, %v612
  %v634 = vmul.f32 %v570, %v614
  %v635 = vmul.f32 %v571, %v616
  %v636 = vmul.f32 %v572, %v618
  %v637 = vmul.f32 %v573, %v620
  %v638 = vmul.f32 %v574, %v622
  %639 = vadd.xlane.f32.xlu0 %v543
  %v640 = vpop.xlane.xlu0 %639
  %641 = vadd.xlane.f32.xlu0 %v544
  %v642 = vpop.xlane.xlu0 %641
  %643 = vadd.xlane.f32.xlu0 %v545
  %v644 = vpop.xlane.xlu0 %643
  %645 = vadd.xlane.f32.xlu0 %v546
  %v646 = vpop.xlane.xlu0 %645
  %647 = vadd.xlane.f32.xlu0 %v547
  %v648 = vpop.xlane.xlu0 %647
  %649 = vadd.xlane.f32.xlu0 %v548
  %v650 = vpop.xlane.xlu0 %649
  %651 = vadd.xlane.f32.xlu0 %v549
  %v652 = vpop.xlane.xlu0 %651
  %653 = vadd.xlane.f32.xlu0 %v550
  %v654 = vpop.xlane.xlu0 %653
  %655 = vadd.xlane.f32.xlu0 %v551
  %v656 = vpop.xlane.xlu0 %655
  %657 = vadd.xlane.f32.xlu0 %v552
  %v658 = vpop.xlane.xlu0 %657
  %659 = vadd.xlane.f32.xlu0 %v553
  %v660 = vpop.xlane.xlu0 %659
  %661 = vadd.xlane.f32.xlu0 %v554
  %v662 = vpop.xlane.xlu0 %661
  %663 = vadd.xlane.f32.xlu0 %v555
  %v664 = vpop.xlane.xlu0 %663
  %665 = vadd.xlane.f32.xlu0 %v556
  %v666 = vpop.xlane.xlu0 %665
  %667 = vadd.xlane.f32.xlu0 %v557
  %v668 = vpop.xlane.xlu0 %667
  %669 = vadd.xlane.f32.xlu0 %v558
  %v670 = vpop.xlane.xlu0 %669
  %v671 = vadd.f32 %v623, %v640
  %v672 = vadd.f32 %v624, %v642
  %v673 = vadd.f32 %v625, %v644
  %v674 = vadd.f32 %v626, %v646
  %v675 = vadd.f32 %v627, %v648
  %v676 = vadd.f32 %v628, %v650
  %v677 = vadd.f32 %v629, %v652
  %v678 = vadd.f32 %v630, %v654
  %v679 = vadd.f32 %v631, %v656
  %v680 = vadd.f32 %v632, %v658
  %v681 = vadd.f32 %v633, %v660
  %v682 = vadd.f32 %v634, %v662
  %v683 = vadd.f32 %v635, %v664
  %v684 = vadd.f32 %v636, %v666
  %v685 = vadd.f32 %v637, %v668
  %v686 = vadd.f32 %v638, %v670
  %vm687 = vcmask 7168
  %688 = vst.msk [vmem:[#allocation3] sm:$0xff] %vm687, %v671
  %689 = vst.msk [vmem:[#allocation3 + $0x8] sm:$0xff] %vm687, %v672
  %690 = vst.msk [vmem:[#allocation3 + $0x10] sm:$0xff] %vm687, %v673
  %691 = vst.msk [vmem:[#allocation3 + $0x18] sm:$0xff] %vm687, %v674
  %692 = vst.msk [vmem:[#allocation3 + $0x20] sm:$0xff] %vm687, %v675
  %693 = vst.msk [vmem:[#allocation3 + $0x28] sm:$0xff] %vm687, %v676
  %694 = vst.msk [vmem:[#allocation3 + $0x30] sm:$0xff] %vm687, %v677
  %695 = vst.msk [vmem:[#allocation3 + $0x38] sm:$0xff] %vm687, %v678
  %696 = vst.msk [vmem:[#allocation3 + $0x40] sm:$0xff] %vm687, %v679
  %697 = vst.msk [vmem:[#allocation3 + $0x48] sm:$0xff] %vm687, %v680
  %698 = vst.msk [vmem:[#allocation3 + $0x50] sm:$0xff] %vm687, %v681
  %699 = vst.msk [vmem:[#allocation3 + $0x58] sm:$0xff] %vm687, %v682
  %700 = vst.msk [vmem:[#allocation3 + $0x60] sm:$0xff] %vm687, %v683
  %701 = vst.msk [vmem:[#allocation3 + $0x68] sm:$0xff] %vm687, %v684
  %702 = vst.msk [vmem:[#allocation3 + $0x70] sm:$0xff] %vm687, %v685
  %703 = vst.msk [vmem:[#allocation3 + $0x78] sm:$0xff] %vm687, %v686
  %704 = vst.msk [vmem:[#allocation2] sm:$0xff] %vm687, %v399
  %705 = vst.msk [vmem:[#allocation2 + $0x8] sm:$0xff] %vm687, %v400
  %706 = vst.msk [vmem:[#allocation2 + $0x10] sm:$0xff] %vm687, %v401
  %707 = vst.msk [vmem:[#allocation2 + $0x18] sm:$0xff] %vm687, %v402
  %708 = vst.msk [vmem:[#allocation2 + $0x20] sm:$0xff] %vm687, %v403
  %709 = vst.msk [vmem:[#allocation2 + $0x28] sm:$0xff] %vm687, %v404
  %710 = vst.msk [vmem:[#allocation2 + $0x30] sm:$0xff] %vm687, %v405
  %711 = vst.msk [vmem:[#allocation2 + $0x38] sm:$0xff] %vm687, %v406
  %712 = vst.msk [vmem:[#allocation2 + $0x40] sm:$0xff] %vm687, %v407
  %713 = vst.msk [vmem:[#allocation2 + $0x48] sm:$0xff] %vm687, %v408
  %714 = vst.msk [vmem:[#allocation2 + $0x50] sm:$0xff] %vm687, %v409
  %715 = vst.msk [vmem:[#allocation2 + $0x58] sm:$0xff] %vm687, %v410
  %716 = vst.msk [vmem:[#allocation2 + $0x60] sm:$0xff] %vm687, %v411
  %717 = vst.msk [vmem:[#allocation2 + $0x68] sm:$0xff] %vm687, %v412
  %718 = vst.msk [vmem:[#allocation2 + $0x70] sm:$0xff] %vm687, %v413
  %719 = vst.msk [vmem:[#allocation2 + $0x78] sm:$0xff] %vm687, %v414
  %v720 = vld [vmem:[%s1] sm:$0xff]
  %v721 = vld [vmem:[%s1 + $0x8] sm:$0xff]
  %v722 = vld [vmem:[%s1 + $0x10] sm:$0xff]
  %v723 = vld [vmem:[%s1 + $0x18] sm:$0xff]
  %v724 = vld [vmem:[%s1 + $0x20] sm:$0xff]
  %v725 = vld [vmem:[%s1 + $0x28] sm:$0xff]
  %v726 = vld [vmem:[%s1 + $0x30] sm:$0xff]
  %v727 = vld [vmem:[%s1 + $0x38] sm:$0xff]
  %v728 = vld [vmem:[%s1 + $0x40] sm:$0xff]
  %v729 = vld [vmem:[%s1 + $0x48] sm:$0xff]
  %v730 = vld [vmem:[%s1 + $0x50] sm:$0xff]
  %v731 = vld [vmem:[%s1 + $0x58] sm:$0xff]
  %v732 = vld [vmem:[%s1 + $0x60] sm:$0xff]
  %v733 = vld [vmem:[%s1 + $0x68] sm:$0xff]
  %v734 = vld [vmem:[%s1 + $0x70] sm:$0xff]
  %v735 = vld [vmem:[%s1 + $0x78] sm:$0xff]
  %v736 = vld [vmem:[%s2] sm:$0x1]
  %737 = vset.pattern.permute.xlu0 0
  %738 = vperm.xlu0 %737, %v720
  %v739 = vpop.permute.xlu0 %738
  %740 = vset.pattern.permute.xlu0 0
  %741 = vperm.xlu0 %740, %v721
  %v742 = vpop.permute.xlu0 %741
  %743 = vset.pattern.permute.xlu0 0
  %744 = vperm.xlu0 %743, %v722
  %v745 = vpop.permute.xlu0 %744
  %746 = vset.pattern.permute.xlu0 0
  %747 = vperm.xlu0 %746, %v723
  %v748 = vpop.permute.xlu0 %747
  %749 = vset.pattern.permute.xlu0 0
  %750 = vperm.xlu0 %749, %v724
  %v751 = vpop.permute.xlu0 %750
  %752 = vset.pattern.permute.xlu0 0
  %753 = vperm.xlu0 %752, %v725
  %v754 = vpop.permute.xlu0 %753
  %755 = vset.pattern.permute.xlu0 0
  %756 = vperm.xlu0 %755, %v726
  %v757 = vpop.permute.xlu0 %756
  %758 = vset.pattern.permute.xlu0 0
  %759 = vperm.xlu0 %758, %v727
  %v760 = vpop.permute.xlu0 %759
  %761 = vset.pattern.permute.xlu0 0
  %762 = vperm.xlu0 %761, %v728
  %v763 = vpop.permute.xlu0 %762
  %764 = vset.pattern.permute.xlu0 0
  %765 = vperm.xlu0 %764, %v729
  %v766 = vpop.permute.xlu0 %765
  %767 = vset.pattern.permute.xlu0 0
  %768 = vperm.xlu0 %767, %v730
  %v769 = vpop.permute.xlu0 %768
  %770 = vset.pattern.permute.xlu0 0
  %771 = vperm.xlu0 %770, %v731
  %v772 = vpop.permute.xlu0 %771
  %773 = vset.pattern.permute.xlu0 0
  %774 = vperm.xlu0 %773, %v732
  %v775 = vpop.permute.xlu0 %774
  %776 = vset.pattern.permute.xlu0 0
  %777 = vperm.xlu0 %776, %v733
  %v778 = vpop.permute.xlu0 %777
  %779 = vset.pattern.permute.xlu0 0
  %780 = vperm.xlu0 %779, %v734
  %v781 = vpop.permute.xlu0 %780
  %782 = vset.pattern.permute.xlu0 0
  %783 = vperm.xlu0 %782, %v735
  %v784 = vpop.permute.xlu0 %783
  %v785 = vlaneseq
  %v786 = vshrl.u32 %v785, 7
  %v787 = vsub.s32 0, %v786
  %v788 = vrot.slane %v736, %v787
  %vm789 = vcmp.eq.s32.totalorder %v739, %v788
  %vm790 = vcmp.eq.s32.totalorder %v742, %v788
  %vm791 = vcmp.eq.s32.totalorder %v745, %v788
  %vm792 = vcmp.eq.s32.totalorder %v748, %v788
  %vm793 = vcmp.eq.s32.totalorder %v751, %v788
  %vm794 = vcmp.eq.s32.totalorder %v754, %v788
  %vm795 = vcmp.eq.s32.totalorder %v757, %v788
  %vm796 = vcmp.eq.s32.totalorder %v760, %v788
  %vm797 = vcmp.eq.s32.totalorder %v763, %v788
  %vm798 = vcmp.eq.s32.totalorder %v766, %v788
  %vm799 = vcmp.eq.s32.totalorder %v769, %v788
  %vm800 = vcmp.eq.s32.totalorder %v772, %v788
  %vm801 = vcmp.eq.s32.totalorder %v775, %v788
  %vm802 = vcmp.eq.s32.totalorder %v778, %v788
  %vm803 = vcmp.eq.s32.totalorder %v781, %v788
  %vm804 = vcmp.eq.s32.totalorder %v784, %v788
  %v805 = vld [vmem:[#allocation4] sm:$0xff]
  %v806 = vld [vmem:[#allocation4 + $0x8] sm:$0xff]
  %v807 = vld [vmem:[#allocation4 + $0x10] sm:$0xff]
  %v808 = vld [vmem:[#allocation4 + $0x18] sm:$0xff]
  %v809 = vld [vmem:[#allocation4 + $0x20] sm:$0xff]
  %v810 = vld [vmem:[#allocation4 + $0x28] sm:$0xff]
  %v811 = vld [vmem:[#allocation4 + $0x30] sm:$0xff]
  %v812 = vld [vmem:[#allocation4 + $0x38] sm:$0xff]
  %v813 = vld [vmem:[#allocation4 + $0x40] sm:$0xff]
  %v814 = vld [vmem:[#allocation4 + $0x48] sm:$0xff]
  %v815 = vld [vmem:[#allocation4 + $0x50] sm:$0xff]
  %v816 = vld [vmem:[#allocation4 + $0x58] sm:$0xff]
  %v817 = vld [vmem:[#allocation4 + $0x60] sm:$0xff]
  %v818 = vld [vmem:[#allocation4 + $0x68] sm:$0xff]
  %v819 = vld [vmem:[#allocation4 + $0x70] sm:$0xff]
  %v820 = vld [vmem:[#allocation4 + $0x78] sm:$0xff]
  %vm821 = vmxor %vm789, %vm335
  %vm822 = vmxor %vm790, %vm336
  %vm823 = vmxor %vm791, %vm337
  %vm824 = vmxor %vm792, %vm338
  %vm825 = vmxor %vm793, %vm339
  %vm826 = vmxor %vm794, %vm340
  %vm827 = vmxor %vm795, %vm341
  %vm828 = vmxor %vm796, %vm342
  %vm829 = vmxor %vm797, %vm343
  %vm830 = vmxor %vm798, %vm344
  %vm831 = vmxor %vm799, %vm345
  %vm832 = vmxor %vm800, %vm346
  %vm833 = vmxor %vm801, %vm347
  %vm834 = vmxor %vm802, %vm348
  %vm835 = vmxor %vm803, %vm349
  %vm836 = vmxor %vm804, %vm350
  %v837 = vsel %vm821, %v280, 0.0
  %v838 = vsel %vm822, %v281, 0.0
  %v839 = vsel %vm823, %v282, 0.0
  %v840 = vsel %vm824, %v283, 0.0
  %v841 = vsel %vm825, %v284, 0.0
  %v842 = vsel %vm826, %v285, 0.0
  %v843 = vsel %vm827, %v286, 0.0
  %v844 = vsel %vm828, %v287, 0.0
  %v845 = vsel %vm829, %v288, 0.0
  %v846 = vsel %vm830, %v289, 0.0
  %v847 = vsel %vm831, %v290, 0.0
  %v848 = vsel %vm832, %v291, 0.0
  %v849 = vsel %vm833, %v292, 0.0
  %v850 = vsel %vm834, %v293, 0.0
  %v851 = vsel %vm835, %v294, 0.0
  %v852 = vsel %vm836, %v295, 0.0
  %853 = vadd.xlane.f32.xlu0 %v837
  %v854 = vpop.xlane.xlu0 %853
  %855 = vadd.xlane.f32.xlu0 %v838
  %v856 = vpop.xlane.xlu0 %855
  %857 = vadd.xlane.f32.xlu0 %v839
  %v858 = vpop.xlane.xlu0 %857
  %859 = vadd.xlane.f32.xlu0 %v840
  %v860 = vpop.xlane.xlu0 %859
  %861 = vadd.xlane.f32.xlu0 %v841
  %v862 = vpop.xlane.xlu0 %861
  %863 = vadd.xlane.f32.xlu0 %v842
  %v864 = vpop.xlane.xlu0 %863
  %865 = vadd.xlane.f32.xlu0 %v843
  %v866 = vpop.xlane.xlu0 %865
  %867 = vadd.xlane.f32.xlu0 %v844
  %v868 = vpop.xlane.xlu0 %867
  %869 = vadd.xlane.f32.xlu0 %v845
  %v870 = vpop.xlane.xlu0 %869
  %871 = vadd.xlane.f32.xlu0 %v846
  %v872 = vpop.xlane.xlu0 %871
  %873 = vadd.xlane.f32.xlu0 %v847
  %v874 = vpop.xlane.xlu0 %873
  %875 = vadd.xlane.f32.xlu0 %v848
  %v876 = vpop.xlane.xlu0 %875
  %877 = vadd.xlane.f32.xlu0 %v849
  %v878 = vpop.xlane.xlu0 %877
  %879 = vadd.xlane.f32.xlu0 %v850
  %v880 = vpop.xlane.xlu0 %879
  %881 = vadd.xlane.f32.xlu0 %v851
  %v882 = vpop.xlane.xlu0 %881
  %883 = vadd.xlane.f32.xlu0 %v852
  %v884 = vpop.xlane.xlu0 %883
  %v885 = vadd.f32 %v805, %v854
  %v886 = vadd.f32 %v806, %v856
  %v887 = vadd.f32 %v807, %v858
  %v888 = vadd.f32 %v808, %v860
  %v889 = vadd.f32 %v809, %v862
  %v890 = vadd.f32 %v810, %v864
  %v891 = vadd.f32 %v811, %v866
  %v892 = vadd.f32 %v812, %v868
  %v893 = vadd.f32 %v813, %v870
  %v894 = vadd.f32 %v814, %v872
  %v895 = vadd.f32 %v815, %v874
  %v896 = vadd.f32 %v816, %v876
  %v897 = vadd.f32 %v817, %v878
  %v898 = vadd.f32 %v818, %v880
  %v899 = vadd.f32 %v819, %v882
  %v900 = vadd.f32 %v820, %v884
  %901 = vst.msk [vmem:[#allocation4] sm:$0xff] %vm687, %v885
  %902 = vst.msk [vmem:[#allocation4 + $0x8] sm:$0xff] %vm687, %v886
  %903 = vst.msk [vmem:[#allocation4 + $0x10] sm:$0xff] %vm687, %v887
  %904 = vst.msk [vmem:[#allocation4 + $0x18] sm:$0xff] %vm687, %v888
  %905 = vst.msk [vmem:[#allocation4 + $0x20] sm:$0xff] %vm687, %v889
  %906 = vst.msk [vmem:[#allocation4 + $0x28] sm:$0xff] %vm687, %v890
  %907 = vst.msk [vmem:[#allocation4 + $0x30] sm:$0xff] %vm687, %v891
  %908 = vst.msk [vmem:[#allocation4 + $0x38] sm:$0xff] %vm687, %v892
  %909 = vst.msk [vmem:[#allocation4 + $0x40] sm:$0xff] %vm687, %v893
  %910 = vst.msk [vmem:[#allocation4 + $0x48] sm:$0xff] %vm687, %v894
  %911 = vst.msk [vmem:[#allocation4 + $0x50] sm:$0xff] %vm687, %v895
  %912 = vst.msk [vmem:[#allocation4 + $0x58] sm:$0xff] %vm687, %v896
  %913 = vst.msk [vmem:[#allocation4 + $0x60] sm:$0xff] %vm687, %v897
  %914 = vst.msk [vmem:[#allocation4 + $0x68] sm:$0xff] %vm687, %v898
  %915 = vst.msk [vmem:[#allocation4 + $0x70] sm:$0xff] %vm687, %v899
  %916 = vst.msk [vmem:[#allocation4 + $0x78] sm:$0xff] %vm687, %v900
  // Predicated region
  $region30: #{tpu_custom_call.1} parent=0 // pred_check
    %p917 = pneg %p23
  $region31: #{tpu_custom_call.1} parent=0 // pred_check_branch
    %919 = sbr.rel (%p917) target = $region33
  $region32: #{tpu_custom_call.1} parent=0 // pred_region
    %v920 = vld [vmem:[#allocation2] sm:$0xff]
    %v921 = vld [vmem:[#allocation2 + $0x8] sm:$0xff]
    %v922 = vld [vmem:[#allocation2 + $0x10] sm:$0xff]
    %v923 = vld [vmem:[#allocation2 + $0x18] sm:$0xff]
    %v924 = vld [vmem:[#allocation2 + $0x20] sm:$0xff]
    %v925 = vld [vmem:[#allocation2 + $0x28] sm:$0xff]
    %v926 = vld [vmem:[#allocation2 + $0x30] sm:$0xff]
    %v927 = vld [vmem:[#allocation2 + $0x38] sm:$0xff]
    %v928 = vld [vmem:[#allocation2 + $0x40] sm:$0xff]
    %v929 = vld [vmem:[#allocation2 + $0x48] sm:$0xff]
    %v930 = vld [vmem:[#allocation2 + $0x50] sm:$0xff]
    %v931 = vld [vmem:[#allocation2 + $0x58] sm:$0xff]
    %v932 = vld [vmem:[#allocation2 + $0x60] sm:$0xff]
    %v933 = vld [vmem:[#allocation2 + $0x68] sm:$0xff]
    %v934 = vld [vmem:[#allocation2 + $0x70] sm:$0xff]
    %v935 = vld [vmem:[#allocation2 + $0x78] sm:$0xff]
    %v936 = vld [vmem:[#allocation3] sm:$0xff]
    %v937 = vld [vmem:[#allocation3 + $0x8] sm:$0xff]
    %v938 = vld [vmem:[#allocation3 + $0x10] sm:$0xff]
    %v939 = vld [vmem:[#allocation3 + $0x18] sm:$0xff]
    %v940 = vld [vmem:[#allocation3 + $0x20] sm:$0xff]
    %v941 = vld [vmem:[#allocation3 + $0x28] sm:$0xff]
    %v942 = vld [vmem:[#allocation3 + $0x30] sm:$0xff]
    %v943 = vld [vmem:[#allocation3 + $0x38] sm:$0xff]
    %v944 = vld [vmem:[#allocation3 + $0x40] sm:$0xff]
    %v945 = vld [vmem:[#allocation3 + $0x48] sm:$0xff]
    %v946 = vld [vmem:[#allocation3 + $0x50] sm:$0xff]
    %v947 = vld [vmem:[#allocation3 + $0x58] sm:$0xff]
    %v948 = vld [vmem:[#allocation3 + $0x60] sm:$0xff]
    %v949 = vld [vmem:[#allocation3 + $0x68] sm:$0xff]
    %v950 = vld [vmem:[#allocation3 + $0x70] sm:$0xff]
    %v951 = vld [vmem:[#allocation3 + $0x78] sm:$0xff]
    %v952 = vlog2.pop %v936
    %v953 = vmul.f32 %v952, 0.6931472
    %v954 = vlog2.pop %v937
    %v955 = vmul.f32 %v954, 0.6931472
    %v956 = vlog2.pop %v938
    %v957 = vmul.f32 %v956, 0.6931472
    %v958 = vlog2.pop %v939
    %v959 = vmul.f32 %v958, 0.6931472
    %v960 = vlog2.pop %v940
    %v961 = vmul.f32 %v960, 0.6931472
    %v962 = vlog2.pop %v941
    %v963 = vmul.f32 %v962, 0.6931472
    %v964 = vlog2.pop %v942
    %v965 = vmul.f32 %v964, 0.6931472
    %v966 = vlog2.pop %v943
    %v967 = vmul.f32 %v966, 0.6931472
    %v968 = vlog2.pop %v944
    %v969 = vmul.f32 %v968, 0.6931472
    %v970 = vlog2.pop %v945
    %v971 = vmul.f32 %v970, 0.6931472
    %v972 = vlog2.pop %v946
    %v973 = vmul.f32 %v972, 0.6931472
    %v974 = vlog2.pop %v947
    %v975 = vmul.f32 %v974, 0.6931472
    %v976 = vlog2.pop %v948
    %v977 = vmul.f32 %v976, 0.6931472
    %v978 = vlog2.pop %v949
    %v979 = vmul.f32 %v978, 0.6931472
    %v980 = vlog2.pop %v950
    %v981 = vmul.f32 %v980, 0.6931472
    %v982 = vlog2.pop %v951
    %v983 = vmul.f32 %v982, 0.6931472
    %v984 = vadd.f32 %v920, %v953
    %v985 = vadd.f32 %v921, %v955
    %v986 = vadd.f32 %v922, %v957
    %v987 = vadd.f32 %v923, %v959
    %v988 = vadd.f32 %v924, %v961
    %v989 = vadd.f32 %v925, %v963
    %v990 = vadd.f32 %v926, %v965
    %v991 = vadd.f32 %v927, %v967
    %v992 = vadd.f32 %v928, %v969
    %v993 = vadd.f32 %v929, %v971
    %v994 = vadd.f32 %v930, %v973
    %v995 = vadd.f32 %v931, %v975
    %v996 = vadd.f32 %v932, %v977
    %v997 = vadd.f32 %v933, %v979
    %v998 = vadd.f32 %v934, %v981
    %v999 = vadd.f32 %v935, %v983
    %v1000 = vld [vmem:[#allocation4] sm:$0xff]
    %v1001 = vld [vmem:[#allocation4 + $0x8] sm:$0xff]
    %v1002 = vld [vmem:[#allocation4 + $0x10] sm:$0xff]
    %v1003 = vld [vmem:[#allocation4 + $0x18] sm:$0xff]
    %v1004 = vld [vmem:[#allocation4 + $0x20] sm:$0xff]
    %v1005 = vld [vmem:[#allocation4 + $0x28] sm:$0xff]
    %v1006 = vld [vmem:[#allocation4 + $0x30] sm:$0xff]
    %v1007 = vld [vmem:[#allocation4 + $0x38] sm:$0xff]
    %v1008 = vld [vmem:[#allocation4 + $0x40] sm:$0xff]
    %v1009 = vld [vmem:[#allocation4 + $0x48] sm:$0xff]
    %v1010 = vld [vmem:[#allocation4 + $0x50] sm:$0xff]
    %v1011 = vld [vmem:[#allocation4 + $0x58] sm:$0xff]
    %v1012 = vld [vmem:[#allocation4 + $0x60] sm:$0xff]
    %v1013 = vld [vmem:[#allocation4 + $0x68] sm:$0xff]
    %v1014 = vld [vmem:[#allocation4 + $0x70] sm:$0xff]
    %v1015 = vld [vmem:[#allocation4 + $0x78] sm:$0xff]
    %v1016 = vld [vmem:[%s5] sm:$0xff]
    %v1017 = vld [vmem:[%s5 + $0x8] sm:$0xff]
    %v1018 = vld [vmem:[%s5 + $0x10] sm:$0xff]
    %v1019 = vld [vmem:[%s5 + $0x18] sm:$0xff]
    %v1020 = vld [vmem:[%s5 + $0x20] sm:$0xff]
    %v1021 = vld [vmem:[%s5 + $0x28] sm:$0xff]
    %v1022 = vld [vmem:[%s5 + $0x30] sm:$0xff]
    %v1023 = vld [vmem:[%s5 + $0x38] sm:$0xff]
    %v1024 = vld [vmem:[%s5 + $0x40] sm:$0xff]
    %v1025 = vld [vmem:[%s5 + $0x48] sm:$0xff]
    %v1026 = vld [vmem:[%s5 + $0x50] sm:$0xff]
    %v1027 = vld [vmem:[%s5 + $0x58] sm:$0xff]
    %v1028 = vld [vmem:[%s5 + $0x60] sm:$0xff]
    %v1029 = vld [vmem:[%s5 + $0x68] sm:$0xff]
    %v1030 = vld [vmem:[%s5 + $0x70] sm:$0xff]
    %v1031 = vld [vmem:[%s5 + $0x78] sm:$0xff]
    %v1032 = vrcp.pop %v1016
    %v1033 = vmul.f32 %v1000, %v1032
    %v1034 = vrcp.pop %v1017
    %v1035 = vmul.f32 %v1001, %v1034
    %v1036 = vrcp.pop %v1018
    %v1037 = vmul.f32 %v1002, %v1036
    %v1038 = vrcp.pop %v1019
    %v1039 = vmul.f32 %v1003, %v1038
    %v1040 = vrcp.pop %v1020
    %v1041 = vmul.f32 %v1004, %v1040
    %v1042 = vrcp.pop %v1021
    %v1043 = vmul.f32 %v1005, %v1042
    %v1044 = vrcp.pop %v1022
    %v1045 = vmul.f32 %v1006, %v1044
    %v1046 = vrcp.pop %v1023
    %v1047 = vmul.f32 %v1007, %v1046
    %v1048 = vrcp.pop %v1024
    %v1049 = vmul.f32 %v1008, %v1048
    %v1050 = vrcp.pop %v1025
    %v1051 = vmul.f32 %v1009, %v1050
    %v1052 = vrcp.pop %v1026
    %v1053 = vmul.f32 %v1010, %v1052
    %v1054 = vrcp.pop %v1027
    %v1055 = vmul.f32 %v1011, %v1054
    %v1056 = vrcp.pop %v1028
    %v1057 = vmul.f32 %v1012, %v1056
    %v1058 = vrcp.pop %v1029
    %v1059 = vmul.f32 %v1013, %v1058
    %v1060 = vrcp.pop %v1030
    %v1061 = vmul.f32 %v1014, %v1060
    %v1062 = vrcp.pop %v1031
    %v1063 = vmul.f32 %v1015, %v1062
    %v1064 = vsub.f32 %v1033, %v984
    %v1065 = vsub.f32 %v1035, %v985
    %v1066 = vsub.f32 %v1037, %v986
    %v1067 = vsub.f32 %v1039, %v987
    %v1068 = vsub.f32 %v1041, %v988
    %v1069 = vsub.f32 %v1043, %v989
    %v1070 = vsub.f32 %v1045, %v990
    %v1071 = vsub.f32 %v1047, %v991
    %v1072 = vsub.f32 %v1049, %v992
    %v1073 = vsub.f32 %v1051, %v993
    %v1074 = vsub.f32 %v1053, %v994
    %v1075 = vsub.f32 %v1055, %v995
    %v1076 = vsub.f32 %v1057, %v996
    %v1077 = vsub.f32 %v1059, %v997
    %v1078 = vsub.f32 %v1061, %v998
    %v1079 = vsub.f32 %v1063, %v999
    %vm1080 = vcmp.lt.s32.totalorder %v314, 16
    %vm1081 = vcmp.lt.s32.totalorder %v315, 16
    %vm1082 = vcmp.lt.s32.totalorder %v316, 16
    %vm1083 = vcmp.lt.s32.totalorder %v317, 16
    %vm1084 = vcmp.lt.s32.totalorder %v318, 16
    %vm1085 = vcmp.lt.s32.totalorder %v319, 16
    %vm1086 = vcmp.lt.s32.totalorder %v320, 16
    %vm1087 = vcmp.lt.s32.totalorder %v321, 16
    %vm1088 = vcmp.lt.s32.totalorder %v322, 16
    %vm1089 = vcmp.lt.s32.totalorder %v323, 16
    %vm1090 = vcmp.lt.s32.totalorder %v324, 16
    %vm1091 = vcmp.lt.s32.totalorder %v325, 16
    %vm1092 = vcmp.lt.s32.totalorder %v326, 16
    %vm1093 = vcmp.lt.s32.totalorder %v327, 16
    %vm1094 = vcmp.lt.s32.totalorder %v328, 16
    %vm1095 = vcmp.lt.s32.totalorder %v329, 16
    %v1096 = vmul.f32 %v1064, -1.0
    %v1097 = vmul.f32 %v1065, -1.0
    %v1098 = vmul.f32 %v1066, -1.0
    %v1099 = vmul.f32 %v1067, -1.0
    %v1100 = vmul.f32 %v1068, -1.0
    %v1101 = vmul.f32 %v1069, -1.0
    %v1102 = vmul.f32 %v1070, -1.0
    %v1103 = vmul.f32 %v1071, -1.0
    %v1104 = vmul.f32 %v1072, -1.0
    %v1105 = vmul.f32 %v1073, -1.0
    %v1106 = vmul.f32 %v1074, -1.0
    %v1107 = vmul.f32 %v1075, -1.0
    %v1108 = vmul.f32 %v1076, -1.0
    %v1109 = vmul.f32 %v1077, -1.0
    %v1110 = vmul.f32 %v1078, -1.0
    %v1111 = vmul.f32 %v1079, -1.0
    %v1112 = vsel %vm1080, %v1096, 0.0
    %v1113 = vsel %vm1081, %v1097, 0.0
    %v1114 = vsel %vm1082, %v1098, 0.0
    %v1115 = vsel %vm1083, %v1099, 0.0
    %v1116 = vsel %vm1084, %v1100, 0.0
    %v1117 = vsel %vm1085, %v1101, 0.0
    %v1118 = vsel %vm1086, %v1102, 0.0
    %v1119 = vsel %vm1087, %v1103, 0.0
    %v1120 = vsel %vm1088, %v1104, 0.0
    %v1121 = vsel %vm1089, %v1105, 0.0
    %v1122 = vsel %vm1090, %v1106, 0.0
    %v1123 = vsel %vm1091, %v1107, 0.0
    %v1124 = vsel %vm1092, %v1108, 0.0
    %v1125 = vsel %vm1093, %v1109, 0.0
    %v1126 = vsel %vm1094, %v1110, 0.0
    %v1127 = vsel %vm1095, %v1111, 0.0
    %1128 = vst.msk [vmem:[%s6] sm:$0xff] %vm687, %v1112
    %1129 = vst.msk [vmem:[%s6 + $0x8] sm:$0xff] %vm687, %v1113
    %1130 = vst.msk [vmem:[%s6 + $0x10] sm:$0xff] %vm687, %v1114
    %1131 = vst.msk [vmem:[%s6 + $0x18] sm:$0xff] %vm687, %v1115
    %1132 = vst.msk [vmem:[%s6 + $0x20] sm:$0xff] %vm687, %v1116
    %1133 = vst.msk [vmem:[%s6 + $0x28] sm:$0xff] %vm687, %v1117
    %1134 = vst.msk [vmem:[%s6 + $0x30] sm:$0xff] %vm687, %v1118
    %1135 = vst.msk [vmem:[%s6 + $0x38] sm:$0xff] %vm687, %v1119
    %1136 = vst.msk [vmem:[%s6 + $0x40] sm:$0xff] %vm687, %v1120
    %1137 = vst.msk [vmem:[%s6 + $0x48] sm:$0xff] %vm687, %v1121
    %1138 = vst.msk [vmem:[%s6 + $0x50] sm:$0xff] %vm687, %v1122
    %1139 = vst.msk [vmem:[%s6 + $0x58] sm:$0xff] %vm687, %v1123
    %1140 = vst.msk [vmem:[%s6 + $0x60] sm:$0xff] %vm687, %v1124
    %1141 = vst.msk [vmem:[%s6 + $0x68] sm:$0xff] %vm687, %v1125
    %1142 = vst.msk [vmem:[%s6 + $0x70] sm:$0xff] %vm687, %v1126
    %1143 = vst.msk [vmem:[%s6 + $0x78] sm:$0xff] %vm687, %v1127
  $region33: #{tpu_custom_call.1} parent=0 // pred_fallthru
    _
  // Predicated region
  $region34: #{tpu_custom_call.1} parent=0 // pred_check
    _
  $region35: #{tpu_custom_call.1} parent=0 // pred_check_branch
    %1145 = sbr.rel (0) target = $region37
  $region36: #{tpu_custom_call.1} parent=0 // pred_region
    _
  $region37: #{tpu_custom_call.1} parent=0 // pred_fallthru
    _
  // Predicated region
  $region38: #{tpu_custom_call.1} parent=0 // pred_check
    _
  $region39: #{tpu_custom_call.1} parent=0 // pred_check_branch
    %1147 = sbr.rel (0) target = $region41
  $region40: #{tpu_custom_call.1} parent=0 // pred_region
    _
  $region41: #{tpu_custom_call.1} parent=0 // pred_fallthru
    _

</llo_original>
